<compile_context>
chip_gen: v7x
topology: tpu7x:2x2x1
jax: 0.10.0
libtpu: 0.0.40
codegen_flags: <defaults>
</compile_context>

<pallas_src>
import functools

import jax
import jax.numpy as jnp
from jax.experimental import pallas as pl
from jax.experimental.pallas import tpu as pltpu


# ----------------------------------------------------------------------------
# Pallas kernel: 3x3 "same" conv (no bias) on a flattened, width-padded tile.
# ----------------------------------------------------------------------------
def _conv3x3_taps_kernel(x_ref, w_ref, o_ref, *, wp):
    """x_ref: ((th+2)*wp + 8, C) bf16   flattened padded row window (row-major, width wp)
       w_ref: (9, C, Cout)       bf16   per-tap weight matrices, tap index = dy*3+dx
       o_ref: (th*wp, Cout)      f32    conv output in flat padded-width coordinates
    Each output flat position j = h_local*wp + w_col; tap (dy,dx) contributes
    x_flat[j + dy*wp + dx] @ w[dy*3+dx].  Columns w_col in {wp-2, wp-1} are junk
    (horizontally wrapped) and are discarded by the wrapper."""
    n = o_ref.shape[0]
    acc = jnp.zeros(o_ref.shape, jnp.float32)
    for dy in range(3):
        for dx in range(3):
            off = dy * wp + dx                         # static slice start
            tap = x_ref[off:off + n, :]                # (n, C) bf16, contiguous rows
            acc = acc + jnp.dot(tap, w_ref[dy * 3 + dx],
                                preferred_element_type=jnp.float32)
    o_ref[...] = acc


def _pick_row_tile(h, wp, c, cout, budget_bytes=4 << 20):
    """Largest divisor of h whose (double-buffered) tile fits the VMEM budget; keep
    >= 2 tiles when h is large enough so a dual-TC chip (v7x) can split the grid."""
    th = 1
    for d in range(1, h + 1):
        if h % d:
            continue
        tile_bytes = (d * wp * cout * 4                 # f32 output tile
                      + ((d + 2) * wp + 8) * c * 2      # bf16 input tile
                      + 9 * c * cout * 2)               # bf16 weights
        if tile_bytes * 2 <= budget_bytes:              # ~double buffering
            th = d
    if th == h and h >= 16 and h % 2 == 0:
        th = h // 2
    return th


def conv3x3_pixelshuffle(x_nchw, weight):
    """PyTorch semantics: Conv2d(C, 2C, 3, stride=1, padding=1, bias=False) followed by
    PixelShuffle(2).  x_nchw: (B, C, H, W) f32; weight: (2C, C, 3, 3) torch layout."""
    B, C, H, W = x_nchw.shape
    Cout = weight.shape[0]
    assert weight.shape == (Cout, C, 3, 3) and Cout % 4 == 0

    # NCHW -> NHWC (channels on lanes), zero-pad spatially for the 3x3 "same" conv.
    x = jnp.transpose(x_nchw, (0, 2, 3, 1))
    xp = jnp.pad(x, ((0, 0), (1, 1), (1, 1), (0, 0)))          # (B, H+2, W+2, C)
    Wp = W + 2

    th = _pick_row_tile(H, Wp, C, Cout)
    rt = H // th
    rows_out = th * Wp
    rows_in = (th + 2) * Wp + 8        # +8 zero rows so every tap slice stays in-bounds

    # Overlapping (th+2)-row windows per tile (2 halo rows duplicated per tile), then
    # flatten rows row-major and cast to bf16 for the MXU.
    win = jnp.arange(rt)[:, None] * th + jnp.arange(th + 2)[None, :]   # (rt, th+2)
    xt = xp[:, win]                                            # (B, rt, th+2, Wp, C)
    xt = xt.reshape(B, rt, (th + 2) * Wp, C)
    xt = jnp.pad(xt, ((0, 0), (0, 0), (0, 8), (0, 0))).astype(jnp.bfloat16)

    # Torch (Cout, Cin, kh, kw) -> per-tap (9, Cin, Cout) bf16 matrices.
    wt = jnp.transpose(weight, (2, 3, 1, 0)).reshape(9, C, Cout).astype(jnp.bfloat16)

    kernel = functools.partial(_conv3x3_taps_kernel, wp=Wp)
    y = pl.pallas_call(
        kernel,
        out_shape=jax.ShapeDtypeStruct((B, rt, rows_out, Cout), jnp.float32),
        grid=(B, rt),
        in_specs=[
            pl.BlockSpec((None, None, rows_in, C), lambda b, t: (b, t, 0, 0)),
            pl.BlockSpec((9, C, Cout), lambda b, t: (0, 0, 0)),   # resident weights
        ],
        out_specs=pl.BlockSpec((None, None, rows_out, Cout), lambda b, t: (b, t, 0, 0)),
        compiler_params=pltpu.CompilerParams(
            dimension_semantics=("parallel", "parallel"),
            vmem_limit_bytes=32 * 1024 * 1024,
        ),
    )(xt, wt)

    # Drop the 2 junk columns per padded row -> conv output in NHWC.
    conv = y.reshape(B, rt, th, Wp, Cout)[:, :, :, :W, :].reshape(B, H, W, Cout)

    # PixelShuffle(2) straight to NCHW: out[b, c, 2h+i, 2w+j] = conv[b, h, w, 4c+2i+j].
    cq = Cout // 4
    out = conv.reshape(B, H, W, cq, 2, 2).transpose(0, 3, 1, 4, 2, 5)
    return out.reshape(B, cq, 2 * H, 2 * W)


def upsample_fwd(x_nchw, weight):
    return conv3x3_pixelshuffle(x_nchw, weight)


# ----------------------------------------------------------------------------
# Pure-JAX reference (same bf16 operand rounding, f32 math) for a sanity check.
# ----------------------------------------------------------------------------
def upsample_ref(x_nchw, weight):
    xb = x_nchw.astype(jnp.bfloat16).astype(jnp.float32)
    wb = weight.astype(jnp.bfloat16).astype(jnp.float32)
    y = jax.lax.conv_general_dilated(
        xb, wb, window_strides=(1, 1), padding=((1, 1), (1, 1)),
        dimension_numbers=("NCHW", "OIHW", "NCHW"),
        precision=jax.lax.Precision.HIGHEST)
    B, C2, H, W = y.shape
    cq = C2 // 4
    y = y.reshape(B, cq, 2, 2, H, W).transpose(0, 1, 4, 2, 5, 3)
    return y.reshape(B, cq, 2 * H, 2 * W)


# ----------------------------------------------------------------------------
if __name__ == "__main__":
    N_FEAT = 8
    B, H, W = 2, 16, 16

    key = jax.random.PRNGKey(0)
    kx, kw = jax.random.split(key)
    x = jax.random.normal(kx, (B, N_FEAT, H, W), jnp.float32)          # NCHW like torch
    weight = 0.05 * jax.random.normal(kw, (2 * N_FEAT, N_FEAT, 3, 3), jnp.float32)

    fwd = jax.jit(upsample_fwd)
    out = fwd(x, weight)
    jax.block_until_ready(out)

    assert out.shape == (B, N_FEAT // 2, 2 * H, 2 * W), out.shape
    assert bool(jnp.all(jnp.isfinite(out)))

    ref = upsample_ref(x, weight)
    max_err = float(jnp.max(jnp.abs(out - ref)))
    assert max_err < 2e-3, f"max abs error vs reference: {max_err}"

    print("KERNEL_OK")
</pallas_src>

<mosaic_0001>
module attributes {stable_mosaic.version = 11 : i64} {
  func.func @_conv3x3_taps_kernel(%arg0: i32, %arg1: i32, %arg2: memref<1x1x188x8xbf16, #tpu.memory_space<vmem>>, %arg3: memref<9x8x16xbf16, #tpu.memory_space<vmem>>, %arg4: memref<1x1x144x16xf32, #tpu.memory_space<vmem>>) attributes {dimension_semantics = [#tpu.dimension_semantics<parallel>, #tpu.dimension_semantics<parallel>], iteration_bounds = array<i64: 2, 2>, scalar_prefetch = 0 : i64, scratch_operands = 0 : i64, tpu.core_type = #tpu.core_type<tc>, window_params = [{transform_indices = @transform_0, window_bounds = array<i64: 1, 1, 188, 8>}, {pipeline_mode = #tpu.pipeline_mode<synchronous>, transform_indices = @transform_1, window_bounds = array<i64: 9, 8, 16>}, {transform_indices = @transform_2, window_bounds = array<i64: 1, 1, 144, 16>}]} {
    %cst = arith.constant 0.000000e+00 : f32
    %0 = vector.broadcast %cst : f32 to vector<144x16xf32>
    %c0 = arith.constant 0 : index
    %c0_0 = arith.constant 0 : index
    %c0_1 = arith.constant 0 : index
    %c0_2 = arith.constant 0 : index
    %1 = vector.load %arg2[%c0, %c0_0, %c0_1, %c0_2] : memref<1x1x188x8xbf16, #tpu.memory_space<vmem>>, vector<1x1x144x8xbf16>
    %2 = vector.shape_cast %1 : vector<1x1x144x8xbf16> to vector<144x8xbf16>
    %c0_3 = arith.constant 0 : index
    %c0_4 = arith.constant 0 : index
    %c0_5 = arith.constant 0 : index
    %3 = vector.load %arg3[%c0_3, %c0_4, %c0_5] : memref<9x8x16xbf16, #tpu.memory_space<vmem>>, vector<1x8x16xbf16>
    %4 = vector.shape_cast %3 : vector<1x8x16xbf16> to vector<8x16xbf16>
    %cst_6 = arith.constant dense<0.000000e+00> : vector<144x16xf32>
    %5 = tpu.matmul %2, %4, %cst_6 {dimension_numbers = #tpu.dot_dimension_numbers<[1], [0], [0], [1], [0, 0, 1, 1], [], []>} : vector<144x8xbf16>, vector<8x16xbf16>, vector<144x16xf32> -> vector<144x16xf32>
    %6 = arith.addf %0, %5 : vector<144x16xf32>
    %c0_7 = arith.constant 0 : index
    %c0_8 = arith.constant 0 : index
    %c1 = arith.constant 1 : index
    %c0_9 = arith.constant 0 : index
    %7 = vector.load %arg2[%c0_7, %c0_8, %c1, %c0_9] : memref<1x1x188x8xbf16, #tpu.memory_space<vmem>>, vector<1x1x144x8xbf16>
    %8 = vector.shape_cast %7 : vector<1x1x144x8xbf16> to vector<144x8xbf16>
    %c1_10 = arith.constant 1 : index
    %c0_11 = arith.constant 0 : index
    %c0_12 = arith.constant 0 : index
    %9 = vector.load %arg3[%c1_10, %c0_11, %c0_12] : memref<9x8x16xbf16, #tpu.memory_space<vmem>>, vector<1x8x16xbf16>
    %10 = vector.shape_cast %9 : vector<1x8x16xbf16> to vector<8x16xbf16>
    %cst_13 = arith.constant dense<0.000000e+00> : vector<144x16xf32>
    %11 = tpu.matmul %8, %10, %cst_13 {dimension_numbers = #tpu.dot_dimension_numbers<[1], [0], [0], [1], [0, 0, 1, 1], [], []>} : vector<144x8xbf16>, vector<8x16xbf16>, vector<144x16xf32> -> vector<144x16xf32>
    %12 = arith.addf %6, %11 : vector<144x16xf32>
    %c0_14 = arith.constant 0 : index
    %c0_15 = arith.constant 0 : index
    %c2 = arith.constant 2 : index
    %c0_16 = arith.constant 0 : index
    %13 = vector.load %arg2[%c0_14, %c0_15, %c2, %c0_16] : memref<1x1x188x8xbf16, #tpu.memory_space<vmem>>, vector<1x1x144x8xbf16>
    %14 = vector.shape_cast %13 : vector<1x1x144x8xbf16> to vector<144x8xbf16>
    %c2_17 = arith.constant 2 : index
    %c0_18 = arith.constant 0 : index
    %c0_19 = arith.constant 0 : index
    %15 = vector.load %arg3[%c2_17, %c0_18, %c0_19] : memref<9x8x16xbf16, #tpu.memory_space<vmem>>, vector<1x8x16xbf16>
    %16 = vector.shape_cast %15 : vector<1x8x16xbf16> to vector<8x16xbf16>
    %cst_20 = arith.constant dense<0.000000e+00> : vector<144x16xf32>
    %17 = tpu.matmul %14, %16, %cst_20 {dimension_numbers = #tpu.dot_dimension_numbers<[1], [0], [0], [1], [0, 0, 1, 1], [], []>} : vector<144x8xbf16>, vector<8x16xbf16>, vector<144x16xf32> -> vector<144x16xf32>
    %18 = arith.addf %12, %17 : vector<144x16xf32>
    %c0_21 = arith.constant 0 : index
    %c0_22 = arith.constant 0 : index
    %c18 = arith.constant 18 : index
    %c0_23 = arith.constant 0 : index
    %19 = vector.load %arg2[%c0_21, %c0_22, %c18, %c0_23] : memref<1x1x188x8xbf16, #tpu.memory_space<vmem>>, vector<1x1x144x8xbf16>
    %20 = vector.shape_cast %19 : vector<1x1x144x8xbf16> to vector<144x8xbf16>
    %c3 = arith.constant 3 : index
    %c0_24 = arith.constant 0 : index
    %c0_25 = arith.constant 0 : index
    %21 = vector.load %arg3[%c3, %c0_24, %c0_25] : memref<9x8x16xbf16, #tpu.memory_space<vmem>>, vector<1x8x16xbf16>
    %22 = vector.shape_cast %21 : vector<1x8x16xbf16> to vector<8x16xbf16>
    %cst_26 = arith.constant dense<0.000000e+00> : vector<144x16xf32>
    %23 = tpu.matmul %20, %22, %cst_26 {dimension_numbers = #tpu.dot_dimension_numbers<[1], [0], [0], [1], [0, 0, 1, 1], [], []>} : vector<144x8xbf16>, vector<8x16xbf16>, vector<144x16xf32> -> vector<144x16xf32>
    %24 = arith.addf %18, %23 : vector<144x16xf32>
    %c0_27 = arith.constant 0 : index
    %c0_28 = arith.constant 0 : index
    %c19 = arith.constant 19 : index
    %c0_29 = arith.constant 0 : index
    %25 = vector.load %arg2[%c0_27, %c0_28, %c19, %c0_29] : memref<1x1x188x8xbf16, #tpu.memory_space<vmem>>, vector<1x1x144x8xbf16>
    %26 = vector.shape_cast %25 : vector<1x1x144x8xbf16> to vector<144x8xbf16>
    %c4 = arith.constant 4 : index
    %c0_30 = arith.constant 0 : index
    %c0_31 = arith.constant 0 : index
    %27 = vector.load %arg3[%c4, %c0_30, %c0_31] : memref<9x8x16xbf16, #tpu.memory_space<vmem>>, vector<1x8x16xbf16>
    %28 = vector.shape_cast %27 : vector<1x8x16xbf16> to vector<8x16xbf16>
    %cst_32 = arith.constant dense<0.000000e+00> : vector<144x16xf32>
    %29 = tpu.matmul %26, %28, %cst_32 {dimension_numbers = #tpu.dot_dimension_numbers<[1], [0], [0], [1], [0, 0, 1, 1], [], []>} : vector<144x8xbf16>, vector<8x16xbf16>, vector<144x16xf32> -> vector<144x16xf32>
    %30 = arith.addf %24, %29 : vector<144x16xf32>
    %c0_33 = arith.constant 0 : index
    %c0_34 = arith.constant 0 : index
    %c20 = arith.constant 20 : index
    %c0_35 = arith.constant 0 : index
    %31 = vector.load %arg2[%c0_33, %c0_34, %c20, %c0_35] : memref<1x1x188x8xbf16, #tpu.memory_space<vmem>>, vector<1x1x144x8xbf16>
    %32 = vector.shape_cast %31 : vector<1x1x144x8xbf16> to vector<144x8xbf16>
    %c5 = arith.constant 5 : index
    %c0_36 = arith.constant 0 : index
    %c0_37 = arith.constant 0 : index
    %33 = vector.load %arg3[%c5, %c0_36, %c0_37] : memref<9x8x16xbf16, #tpu.memory_space<vmem>>, vector<1x8x16xbf16>
    %34 = vector.shape_cast %33 : vector<1x8x16xbf16> to vector<8x16xbf16>
    %cst_38 = arith.constant dense<0.000000e+00> : vector<144x16xf32>
    %35 = tpu.matmul %32, %34, %cst_38 {dimension_numbers = #tpu.dot_dimension_numbers<[1], [0], [0], [1], [0, 0, 1, 1], [], []>} : vector<144x8xbf16>, vector<8x16xbf16>, vector<144x16xf32> -> vector<144x16xf32>
    %36 = arith.addf %30, %35 : vector<144x16xf32>
    %c0_39 = arith.constant 0 : index
    %c0_40 = arith.constant 0 : index
    %c36 = arith.constant 36 : index
    %c0_41 = arith.constant 0 : index
    %37 = vector.load %arg2[%c0_39, %c0_40, %c36, %c0_41] : memref<1x1x188x8xbf16, #tpu.memory_space<vmem>>, vector<1x1x144x8xbf16>
    %38 = vector.shape_cast %37 : vector<1x1x144x8xbf16> to vector<144x8xbf16>
    %c6 = arith.constant 6 : index
    %c0_42 = arith.constant 0 : index
    %c0_43 = arith.constant 0 : index
    %39 = vector.load %arg3[%c6, %c0_42, %c0_43] : memref<9x8x16xbf16, #tpu.memory_space<vmem>>, vector<1x8x16xbf16>
    %40 = vector.shape_cast %39 : vector<1x8x16xbf16> to vector<8x16xbf16>
    %cst_44 = arith.constant dense<0.000000e+00> : vector<144x16xf32>
    %41 = tpu.matmul %38, %40, %cst_44 {dimension_numbers = #tpu.dot_dimension_numbers<[1], [0], [0], [1], [0, 0, 1, 1], [], []>} : vector<144x8xbf16>, vector<8x16xbf16>, vector<144x16xf32> -> vector<144x16xf32>
    %42 = arith.addf %36, %41 : vector<144x16xf32>
    %c0_45 = arith.constant 0 : index
    %c0_46 = arith.constant 0 : index
    %c37 = arith.constant 37 : index
    %c0_47 = arith.constant 0 : index
    %43 = vector.load %arg2[%c0_45, %c0_46, %c37, %c0_47] : memref<1x1x188x8xbf16, #tpu.memory_space<vmem>>, vector<1x1x144x8xbf16>
    %44 = vector.shape_cast %43 : vector<1x1x144x8xbf16> to vector<144x8xbf16>
    %c7 = arith.constant 7 : index
    %c0_48 = arith.constant 0 : index
    %c0_49 = arith.constant 0 : index
    %45 = vector.load %arg3[%c7, %c0_48, %c0_49] : memref<9x8x16xbf16, #tpu.memory_space<vmem>>, vector<1x8x16xbf16>
    %46 = vector.shape_cast %45 : vector<1x8x16xbf16> to vector<8x16xbf16>
    %cst_50 = arith.constant dense<0.000000e+00> : vector<144x16xf32>
    %47 = tpu.matmul %44, %46, %cst_50 {dimension_numbers = #tpu.dot_dimension_numbers<[1], [0], [0], [1], [0, 0, 1, 1], [], []>} : vector<144x8xbf16>, vector<8x16xbf16>, vector<144x16xf32> -> vector<144x16xf32>
    %48 = arith.addf %42, %47 : vector<144x16xf32>
    %c0_51 = arith.constant 0 : index
    %c0_52 = arith.constant 0 : index
    %c38 = arith.constant 38 : index
    %c0_53 = arith.constant 0 : index
    %49 = vector.load %arg2[%c0_51, %c0_52, %c38, %c0_53] : memref<1x1x188x8xbf16, #tpu.memory_space<vmem>>, vector<1x1x144x8xbf16>
    %50 = vector.shape_cast %49 : vector<1x1x144x8xbf16> to vector<144x8xbf16>
    %c8 = arith.constant 8 : index
    %c0_54 = arith.constant 0 : index
    %c0_55 = arith.constant 0 : index
    %51 = vector.load %arg3[%c8, %c0_54, %c0_55] : memref<9x8x16xbf16, #tpu.memory_space<vmem>>, vector<1x8x16xbf16>
    %52 = vector.shape_cast %51 : vector<1x8x16xbf16> to vector<8x16xbf16>
    %cst_56 = arith.constant dense<0.000000e+00> : vector<144x16xf32>
    %53 = tpu.matmul %50, %52, %cst_56 {dimension_numbers = #tpu.dot_dimension_numbers<[1], [0], [0], [1], [0, 0, 1, 1], [], []>} : vector<144x8xbf16>, vector<8x16xbf16>, vector<144x16xf32> -> vector<144x16xf32>
    %54 = arith.addf %48, %53 : vector<144x16xf32>
    %c0_57 = arith.constant 0 : index
    %c0_58 = arith.constant 0 : index
    %c0_59 = arith.constant 0 : index
    %c0_60 = arith.constant 0 : index
    %55 = vector.load %arg4[%c0_57, %c0_58, %c0_59, %c0_60] : memref<1x1x144x16xf32, #tpu.memory_space<vmem>>, vector<1x1x144x16xf32>
    %56 = vector.shape_cast %55 : vector<1x1x144x16xf32> to vector<144x16xf32>
    %57 = vector.shape_cast %54 : vector<144x16xf32> to vector<1x1x144x16xf32>
    tpu.vector_store %arg4[%c0_57, %c0_58, %c0_59, %c0_60], %57 {strides = array<i32>} : memref<1x1x144x16xf32, #tpu.memory_space<vmem>>, vector<1x1x144x16xf32>,
    return
  }
  func.func @transform_0(%arg0: i32, %arg1: i32) -> (i32, i32, i32, i32) {
    %c0_i32 = arith.constant 0 : i32
    %c0_i32_0 = arith.constant 0 : i32
    %c0_i32_1 = arith.constant 0 : i32
    return %arg0, %arg1, %c0_i32, %c0_i32_0 : i32, i32, i32, i32
  }
  func.func @transform_1(%arg0: i32, %arg1: i32) -> (i32, i32, i32) {
    %c0_i32 = arith.constant 0 : i32
    %c0_i32_0 = arith.constant 0 : i32
    %c0_i32_1 = arith.constant 0 : i32
    %c0_i32_2 = arith.constant 0 : i32
    return %c0_i32, %c0_i32_0, %c0_i32_1 : i32, i32, i32
  }
  func.func @transform_2(%arg0: i32, %arg1: i32) -> (i32, i32, i32, i32) {
    %c0_i32 = arith.constant 0 : i32
    %c0_i32_0 = arith.constant 0 : i32
    %c0_i32_1 = arith.constant 0 : i32
    return %arg0, %arg1, %c0_i32, %c0_i32_0 : i32, i32, i32, i32
  }
}

</mosaic_0001>

<llo_original>
// kernel: upsample_fwd.1
$region0: #{upsample_fwd.1}
  #allocation0 [shape = 'u32[]', space=smem, size = 0x4, offset = 0x4, fixed_abs, tag = 'smem constant byte address 0x4 - core index']
  #allocation1 [shape = 'u32[144,128]{1,0:T(1,128)}', space=vmem, size = 0x12000, scoped, tag = 'internal scratch']
  %s0 = inlined_call_operand.vmem [shape: bf16[2,2,188,8], index: 0, kind: input, shape index: {}]
  %s1 = inlined_call_operand.vmem [shape: bf16[9,8,16], index: 1, kind: input, shape index: {}]
  %s2 = inlined_call_operand.vmem [shape: f32[2,2,144,16], index: 2, kind: output, shape index: {}]
  %s3 = sld [smem:[#allocation0]]
  $region41: #{upsample_fwd.1} parent=0
    _
  %s5 = ssub.s32 1, %s3
  %s6 = scalar_select 0, %s5, %s3
  loop: start=0, step=1, limit=6
  $region2: #{upsample_fwd.1} parent=0 // loop_pre_header
    _
  $region3: #{upsample_fwd.1} parent=0 // loop_header
    %s8 = sphi 0, %s12
    %p9 = scmp.ge.s32.totalorder %s8, 6
    %s15 = sphi 0, %s27
    %s16 = sphi 0, %s23
    %s17 = sphi 0, %s15
    %s18 = sphi 0, %s16
    %s19 = sphi 0, %s17
    %s20 = sphi 0, %s18
    %s32 = sphi 0, %s34
    %s35 = sphi 0, %s32
    %s36 = sphi 0, %s35
    %s52 = sphi 0, %s36
    %s56 = sphi 0, %s56
    %s58 = sphi 0, %s56
    %s59 = sphi 0, %s58
    %s73 = sphi 0, %s59
    %s81 = sphi 0, %s83
    %s84 = sphi 0, %s81
    %s85 = sphi 0, %s84
    %s101 = sphi 0, %s85
  $region4: #{upsample_fwd.1} parent=0 // loop_header_branch
    %11 = sbr.rel (%p9) target = $region8
  $region5: #{upsample_fwd.1} parent=0 // loop_body
    %s13 = ssub.s32 %s8, 1
    %s14 = ssub.s32 %s8, 2
    %s21 = sadd.s32 1, %s16
    %p22 = scmp.ge.s32.totalorder %s21, 2
    %s23 = scalar_select %p22, 0, %s21
    %s24 = sadd.s32 1, %s15
    %s25 = scalar_select %p22, %s24, %s15
    %p26 = scmp.ge.s32.totalorder %s25, 2
    %s27 = scalar_select %p26, 0, %s25
    %s28 = ssub.s32 %s15, %s27
    %s29 = ssub.s32 %s16, %s23
    %s30 = sor.u32 %s28, %s29
    %p31 = scmp.eq.s32.totalorder %s30, 0
    %s33 = sadd.s32 %s32, 1
    %s34 = scalar_select %p31, %s32, %s33
    %p37 = pneg %p31
    %p38 = scmp.eq.s32.totalorder %s8, 3
    %p39 = por %p37, %p38
    %p40 = scmp.ne.s32.totalorder %s32, %s35
    %p41 = scmp.eq.s32.totalorder %s8, 0
    %p42 = por %p40, %p41
    %p43 = scmp.ne.s32.totalorder %s32, %s35
    %p44 = scmp.eq.s32.totalorder %s13, 3
    %p45 = por %p43, %p44
    %p46 = scmp.ne.s32.totalorder %s35, %s36
    %p47 = scmp.eq.s32.totalorder %s13, 0
    %p48 = por %p46, %p47
    %p49 = scmp.ne.s32.totalorder %s35, %s36
    %p50 = scmp.eq.s32.totalorder %s14, 3
    %p51 = por %p49, %p50
    %p53 = scmp.ne.s32.totalorder %s36, %s52
    %p54 = scmp.eq.s32.totalorder %s14, 0
    %p55 = por %p53, %p54
    %s57 = sadd.s32 %s56, 1
    %p60 = scmp.eq.s32.totalorder %s8, 3
    %p61 = scmp.ne.s32.totalorder %s56, %s58
    %p62 = scmp.eq.s32.totalorder %s8, 0
    %p63 = por %p61, %p62
    %p64 = scmp.ne.s32.totalorder %s56, %s58
    %p65 = scmp.eq.s32.totalorder %s13, 3
    %p66 = por %p64, %p65
    %p67 = scmp.ne.s32.totalorder %s58, %s59
    %p68 = scmp.eq.s32.totalorder %s13, 0
    %p69 = por %p67, %p68
    %p70 = scmp.ne.s32.totalorder %s58, %s59
    %p71 = scmp.eq.s32.totalorder %s14, 3
    %p72 = por %p70, %p71
    %p74 = scmp.ne.s32.totalorder %s59, %s73
    %p75 = scmp.eq.s32.totalorder %s14, 0
    %p76 = por %p74, %p75
    %s77 = ssub.s32 %s15, %s27
    %s78 = ssub.s32 %s16, %s23
    %s79 = sor.u32 %s77, %s78
    %p80 = scmp.eq.s32.totalorder %s79, 0
    %s82 = sadd.s32 %s81, 1
    %s83 = scalar_select %p80, %s81, %s82
    %p86 = pneg %p80
    %p87 = scmp.eq.s32.totalorder %s8, 3
    %p88 = por %p86, %p87
    %p89 = scmp.ne.s32.totalorder %s81, %s84
    %p90 = scmp.eq.s32.totalorder %s8, 0
    %p91 = por %p89, %p90
    %p92 = scmp.ne.s32.totalorder %s81, %s84
    %p93 = scmp.eq.s32.totalorder %s13, 3
    %p94 = por %p92, %p93
    %p95 = scmp.ne.s32.totalorder %s84, %s85
    %p96 = scmp.eq.s32.totalorder %s13, 0
    %p97 = por %p95, %p96
    %p98 = scmp.ne.s32.totalorder %s84, %s85
    %p99 = scmp.eq.s32.totalorder %s14, 3
    %p100 = por %p98, %p99
    %p102 = scmp.ne.s32.totalorder %s85, %s101
    %p103 = scmp.eq.s32.totalorder %s14, 0
    %p104 = por %p102, %p103
    %p105 = scmp.le.s32.totalorder 1, %s8
    %p106 = scmp.lt.s32.totalorder %s8, 5
    %p107 = pnand %p105, %p106
    %p108 = pneg %p107
    // Predicated region
    $region9: #{upsample_fwd.1} parent=5 // pred_check
      _
    $region10: #{upsample_fwd.1} parent=5 // pred_check_branch
      %110 = sbr.rel (%p107) target = $region12
    $region11: #{upsample_fwd.1} parent=5 // pred_region
      %s111 = ssub.s32 %s8, 1
      // Predicated region
      $region13: #{upsample_fwd.1} parent=11 // pred_check
        %p112 = pneg %p69
      $region14: #{upsample_fwd.1} parent=11 // pred_check_branch
        %114 = sbr.rel (%p112) target = $region16
      $region15: #{upsample_fwd.1} parent=11 // pred_region
        _
      $region16: #{upsample_fwd.1} parent=11 // pred_fallthru
        _
    $region12: #{upsample_fwd.1} parent=5 // pred_fallthru
      _
    %p115 = scmp.lt.s32.totalorder %s8, 4
    // Predicated region
    $region17: #{upsample_fwd.1} parent=5 // pred_check
      %p116 = pneg %p115
    $region18: #{upsample_fwd.1} parent=5 // pred_check_branch
      %118 = sbr.rel (%p116) target = $region20
    $region19: #{upsample_fwd.1} parent=5 // pred_region
      // Predicated region
      $region21: #{upsample_fwd.1} parent=19 // pred_check
        %p119 = pneg %p42
      $region22: #{upsample_fwd.1} parent=19 // pred_check_branch
        %121 = sbr.rel (%p119) target = $region24
      $region23: #{upsample_fwd.1} parent=19 // pred_region
        %p122 = scmp.lt.s32.totalorder %s15, 1
        %s123 = scalar_select %p122, %s15, 1
        %p124 = scmp.lt.s32.totalorder %s16, 1
        %s125 = scalar_select %p124, %s16, 1
        %s126 = smul.addr %s125, 24
        %s127 = smul.addr %s123, 48
        %s128 = sadd.s32 %s126, %s127
        %s129 = smul.addr %s128, 4
        %s130 = scalar_lea.vmem %s0, %s129
      $region24: #{upsample_fwd.1} parent=19 // pred_fallthru
        _
    $region20: #{upsample_fwd.1} parent=5 // pred_fallthru
      _
    %p131 = scmp.le.s32.totalorder 1, %s8
    %p132 = scmp.lt.s32.totalorder %s8, 5
    %p133 = pnand %p131, %p132
    %p134 = pneg %p133
    // Predicated region
    $region25: #{upsample_fwd.1} parent=5 // pred_check
      _
    $region26: #{upsample_fwd.1} parent=5 // pred_check_branch
      %136 = sbr.rel (%p133) target = $region28
    $region27: #{upsample_fwd.1} parent=5 // pred_region
      %s137 = ssub.s32 %s8, 1
      %p138 = scmp.lt.s32.totalorder %s17, 1
      %s139 = scalar_select %p138, %s17, 1
      %p140 = scmp.lt.s32.totalorder %s18, 1
      %s141 = scalar_select %p140, %s18, 1
      %s142 = smul.addr %s141, 24
      %s143 = smul.addr %s139, 48
      %s144 = sadd.s32 %s142, %s143
      %s145 = smul.addr %s144, 4
      %s146 = scalar_lea.vmem %s0, %s145
      %p147 = pneg %p48
      %p148 = pneg %p45
      %p149 = pneg %p69
      %p150 = pneg %p66
      %p151 = pneg %p97
      %p152 = pneg %p94
      %p153 = scmp.lt.s32.totalorder %s17, 1
      %s154 = scalar_select %p153, %s17, 1
      %p155 = scmp.lt.s32.totalorder %s18, 1
      %s156 = scalar_select %p155, %s18, 1
      %s157 = smul.addr %s156, 18
      %s158 = smul.addr %s154, 36
      %s159 = sadd.s32 %s157, %s158
      %s160 = smul.addr %s159, 8
      %s161 = scalar_lea.vmem %s2, %s160
      %p162 = scmp.lt.s32.totalorder %s17, 1
      %s163 = scalar_select %p162, %s17, 1
      %p164 = scmp.lt.s32.totalorder %s18, 1
      %s165 = scalar_select %p164, %s18, 1
      %s166 = smul.addr %s165, 24
      %s167 = smul.addr %s163, 48
      %s168 = sadd.s32 %s166, %s167
      %s169 = smul.addr %s168, 4
      %s170 = scalar_lea.vmem %s0, %s169
      %p171 = scmp.lt.s32.totalorder %s17, 1
      %s172 = scalar_select %p171, %s17, 1
      %p173 = scmp.lt.s32.totalorder %s18, 1
      %s174 = scalar_select %p173, %s18, 1
      %s175 = smul.addr %s174, 18
      %s176 = smul.addr %s172, 36
      %s177 = sadd.s32 %s175, %s176
      %s178 = smul.addr %s177, 8
      %s179 = scalar_lea.vmem %s2, %s178
      %v181 = vld [vmem:[%s170] sm:$0xf]
      %v182 = vld [vmem:[%s170 + $0x4] sm:$0xf]
      %v183 = vld [vmem:[%s170 + $0x8] sm:$0xf]
      %v184 = vld [vmem:[%s170 + $0xc] sm:$0xf]
      %v185 = vld [vmem:[%s170 + $0x10] sm:$0xf]
      %v186 = vld [vmem:[%s170 + $0x14] sm:$0xf]
      %v187 = vld [vmem:[%s170 + $0x18] sm:$0xf]
      %v188 = vld [vmem:[%s170 + $0x1c] sm:$0xf]
      %v189 = vld [vmem:[%s170 + $0x20] sm:$0xf]
      %v190 = vld [vmem:[%s170 + $0x24] sm:$0xf]
      %v191 = vld [vmem:[%s170 + $0x28] sm:$0xf]
      %v192 = vld [vmem:[%s170 + $0x2c] sm:$0xf]
      %v193 = vld [vmem:[%s170 + $0x30] sm:$0xf]
      %v194 = vld [vmem:[%s170 + $0x34] sm:$0xf]
      %v195 = vld [vmem:[%s170 + $0x38] sm:$0xf]
      %v196 = vld [vmem:[%s170 + $0x3c] sm:$0xf]
      %v197 = vld [vmem:[%s170 + $0x40] sm:$0xf]
      %v198 = vld [vmem:[%s170 + $0x44] sm:$0xf]
      %v199 = vld [vmem:[%s1] sm:$0xf]
      %v200 = vld [vmem:[%s170 + $0x48] sm:$0x1]
      %s201 = scalar_lea.vmem %s1, 4
      %v202 = vld [vmem:[%s201] sm:$0xf]
      %v222 = vunpack.c.l.b16 %v181
      %v223 = vunpack.c.l.b16 %v182
      %v224 = vunpack.c.l.b16 %v183
      %v225 = vunpack.c.l.b16 %v184
      %v226 = vunpack.c.l.b16 %v185
      %v227 = vunpack.c.l.b16 %v186
      %v228 = vunpack.c.l.b16 %v187
      %v229 = vunpack.c.l.b16 %v188
      %v230 = vunpack.c.l.b16 %v189
      %v231 = vunpack.c.l.b16 %v190
      %v232 = vunpack.c.l.b16 %v191
      %v233 = vunpack.c.l.b16 %v192
      %v234 = vunpack.c.l.b16 %v193
      %v235 = vunpack.c.l.b16 %v194
      %v236 = vunpack.c.l.b16 %v195
      %v237 = vunpack.c.l.b16 %v196
      %v238 = vunpack.c.l.b16 %v197
      %v239 = vunpack.c.l.b16 %v198
      %v240 = vunpack.c.l.b16 %v200
      %v241 = vpack.c.b16 %v223, %v222
      %v242 = vpack.c.b16 %v225, %v224
      %v243 = vpack.c.b16 %v227, %v226
      %v244 = vpack.c.b16 %v229, %v228
      %v245 = vpack.c.b16 %v231, %v230
      %v246 = vpack.c.b16 %v233, %v232
      %v247 = vpack.c.b16 %v235, %v234
      %v248 = vpack.c.b16 %v237, %v236
      %v249 = vpack.c.b16 %v239, %v238
      %v250 = vpack.c.b16 %v240, %v240
      %vm251 = vsmask.f32 7424
      %v253 = vshrl.u32 %v241, 16
      %v255 = vshll.u32 %v241, 16
      %v257 = vrot.slane %v255, 1
      %v258 = vor.u32 %v253, %v257
      %v260 = vshll.u32 %v242, 16
      %v262 = vrot.slane %v260, 1
      %v263 = vsel %vm251, %v258, %v262
      %v264 = vshrl.u32 %v242, 16
      %v266 = vor.u32 %v264, %v262
      %v268 = vshll.u32 %v243, 16
      %v270 = vrot.slane %v268, 1
      %v271 = vsel %vm251, %v266, %v270
      %v272 = vshrl.u32 %v243, 16
      %v274 = vor.u32 %v272, %v270
      %v276 = vshll.u32 %v244, 16
      %v278 = vrot.slane %v276, 1
      %v279 = vsel %vm251, %v274, %v278
      %v280 = vshrl.u32 %v244, 16
      %v282 = vor.u32 %v280, %v278
      %v284 = vshll.u32 %v245, 16
      %v286 = vrot.slane %v284, 1
      %v287 = vsel %vm251, %v282, %v286
      %v288 = vshrl.u32 %v245, 16
      %v290 = vor.u32 %v288, %v286
      %v292 = vshll.u32 %v246, 16
      %v294 = vrot.slane %v292, 1
      %v295 = vsel %vm251, %v290, %v294
      %v296 = vshrl.u32 %v246, 16
      %v298 = vor.u32 %v296, %v294
      %v300 = vshll.u32 %v247, 16
      %v302 = vrot.slane %v300, 1
      %v303 = vsel %vm251, %v298, %v302
      %v304 = vshrl.u32 %v247, 16
      %v306 = vor.u32 %v304, %v302
      %v308 = vshll.u32 %v248, 16
      %v310 = vrot.slane %v308, 1
      %v311 = vsel %vm251, %v306, %v310
      %v312 = vshrl.u32 %v248, 16
      %v314 = vor.u32 %v312, %v310
      %v316 = vshll.u32 %v249, 16
      %v318 = vrot.slane %v316, 1
      %v319 = vsel %vm251, %v314, %v318
      %v320 = vshrl.u32 %v249, 16
      %v322 = vor.u32 %v320, %v318
      %v324 = vshll.u32 %v250, 16
      %v326 = vrot.slane %v324, 1
      %v327 = vsel %vm251, %v322, %v326
      %vm328 = vcmask 64512
      %v330 = vsel %vm328, %v263, 0
      %v333 = vsel %vm328, %v271, 0
      %v336 = vsel %vm328, %v279, 0
      %v339 = vsel %vm328, %v287, 0
      %v342 = vsel %vm328, %v295, 0
      %v345 = vsel %vm328, %v303, 0
      %v348 = vsel %vm328, %v311, 0
      %v351 = vsel %vm328, %v319, 0
      %v354 = vsel %vm328, %v327, 0
      %vm356 = vcmask 1043456
      %v358 = vsel %vm356, %v202, 0
      %360 = vmatprep.subr.bf16.mxu0 0
      %361 = vmatpush1.bf16.msra.mxu0 %v358
      %362 = vmatprep.subr.bf16.mxu0 0
      %363 = vmatpush1.bf16.msra.mxu0 0
      %364 = vmatprep.subr.bf16.mxu0 0
      %365 = vmatpush1.bf16.msra.mxu0 0
      %366 = vmatprep.subr.bf16.mxu0 0
      %367 = vmatpush1.bf16.msra.mxu0 0
      %368 = vmatprep.subr.bf16.mxu0 0
      %369 = vmatpush1.bf16.msra.mxu0 0
      %370 = vmatprep.subr.bf16.mxu0 0
      %371 = vmatpush1.bf16.msra.mxu0 0
      %372 = vmatprep.subr.bf16.mxu0 0
      %373 = vmatpush1.bf16.msra.mxu0 0
      %374 = vmatprep.subr.bf16.mxu0 0
      %375 = vmatpush1.bf16.msra.mxu0 0
      %376 = vmatprep.subr.bf16.mxu0 0
      %377 = vmatpush1.bf16.msra.mxu0 0
      %378 = vmatprep.subr.bf16.mxu0 0
      %379 = vmatpush1.bf16.msra.mxu0 0
      %380 = vmatprep.subr.bf16.mxu0 0
      %381 = vmatpush1.bf16.msra.mxu0 0
      %382 = vmatprep.subr.bf16.mxu0 0
      %383 = vmatpush1.bf16.msra.mxu0 0
      %384 = vmatprep.subr.bf16.mxu0 0
      %385 = vmatpush1.bf16.msra.mxu0 0
      %386 = vmatprep.subr.bf16.mxu0 0
      %387 = vmatpush1.bf16.msra.mxu0 0
      %388 = vmatprep.subr.bf16.mxu0 0
      %389 = vmatpush1.bf16.msra.mxu0 0
      %390 = vmatprep.subr.bf16.mxu0 0
      %391 = vmatpush1.bf16.msra.mxu0 0
      %392 = vmatprep.mubr.bf16.mxu0 0
      %393 = vmatmul.mubr.bf16.gmra.mrb[0].mxu0 %v330
      %v394 = vpop.f32.mrb[0].mxu0
      %v395 = vadd.f32 0.0, %v394
      %v396 = vpop.f32.mrb[0].mxu0
      %v397 = vpop.f32.mrb[0].mxu0
      %v398 = vadd.f32 0.0, %v397
      %v399 = vpop.f32.mrb[0].mxu0
      %400 = vmatprep.mubr.bf16.mxu0 0
      %401 = vmatmul.mubr.bf16.gmra.mrb[0].mxu0 %v333
      %v402 = vpop.f32.mrb[0].mxu0
      %v403 = vadd.f32 0.0, %v402
      %v404 = vpop.f32.mrb[0].mxu0
      %v405 = vpop.f32.mrb[0].mxu0
      %v406 = vadd.f32 0.0, %v405
      %v407 = vpop.f32.mrb[0].mxu0
      %408 = vmatprep.mubr.bf16.mxu0 0
      %409 = vmatmul.mubr.bf16.gmra.mrb[0].mxu0 %v336
      %v410 = vpop.f32.mrb[0].mxu0
      %v411 = vadd.f32 0.0, %v410
      %v412 = vpop.f32.mrb[0].mxu0
      %v413 = vpop.f32.mrb[0].mxu0
      %v414 = vadd.f32 0.0, %v413
      %v415 = vpop.f32.mrb[0].mxu0
      %416 = vmatprep.mubr.bf16.mxu0 0
      %417 = vmatmul.mubr.bf16.gmra.mrb[0].mxu0 %v339
      %v418 = vpop.f32.mrb[0].mxu0
      %v419 = vadd.f32 0.0, %v418
      %v420 = vpop.f32.mrb[0].mxu0
      %v421 = vpop.f32.mrb[0].mxu0
      %v422 = vadd.f32 0.0, %v421
      %v423 = vpop.f32.mrb[0].mxu0
      %424 = vmatprep.mubr.bf16.mxu0 0
      %425 = vmatmul.mubr.bf16.gmra.mrb[0].mxu0 %v342
      %v426 = vpop.f32.mrb[0].mxu0
      %v427 = vadd.f32 0.0, %v426
      %v428 = vpop.f32.mrb[0].mxu0
      %v429 = vpop.f32.mrb[0].mxu0
      %v430 = vadd.f32 0.0, %v429
      %v431 = vpop.f32.mrb[0].mxu0
      %432 = vmatprep.mubr.bf16.mxu0 0
      %433 = vmatmul.mubr.bf16.gmra.mrb[0].mxu0 %v345
      %v434 = vpop.f32.mrb[0].mxu0
      %v435 = vadd.f32 0.0, %v434
      %v436 = vpop.f32.mrb[0].mxu0
      %v437 = vpop.f32.mrb[0].mxu0
      %v438 = vadd.f32 0.0, %v437
      %v439 = vpop.f32.mrb[0].mxu0
      %440 = vmatprep.mubr.bf16.mxu0 0
      %441 = vmatmul.mubr.bf16.gmra.mrb[0].mxu0 %v348
      %v442 = vpop.f32.mrb[0].mxu0
      %v443 = vadd.f32 0.0, %v442
      %v444 = vpop.f32.mrb[0].mxu0
      %v445 = vpop.f32.mrb[0].mxu0
      %v446 = vadd.f32 0.0, %v445
      %v447 = vpop.f32.mrb[0].mxu0
      %448 = vmatprep.mubr.bf16.mxu0 0
      %449 = vmatmul.mubr.bf16.gmra.mrb[0].mxu0 %v351
      %v450 = vpop.f32.mrb[0].mxu0
      %v451 = vadd.f32 0.0, %v450
      %v452 = vpop.f32.mrb[0].mxu0
      %v453 = vpop.f32.mrb[0].mxu0
      %v454 = vadd.f32 0.0, %v453
      %v455 = vpop.f32.mrb[0].mxu0
      %456 = vmatprep.mubr.bf16.mxu0 0
      %457 = vmatmul.mubr.bf16.gmra.mrb[0].mxu0 %v354
      %v458 = vpop.f32.mrb[0].mxu0
      %v459 = vadd.f32 0.0, %v458
      %v460 = vpop.f32.mrb[0].mxu0
      %v461 = vpop.f32.mrb[0].mxu0
      %v462 = vadd.f32 0.0, %v461
      %v463 = vpop.f32.mrb[0].mxu0
      %464 = vdwg.mxu0
      %v465 = vsel %vm328, %v241, 0
      %v467 = vsel %vm328, %v242, 0
      %v469 = vsel %vm328, %v243, 0
      %v471 = vsel %vm328, %v244, 0
      %v473 = vsel %vm328, %v245, 0
      %v475 = vsel %vm328, %v246, 0
      %v477 = vsel %vm328, %v247, 0
      %v479 = vsel %vm328, %v248, 0
      %v481 = vsel %vm328, %v249, 0
      %v484 = vsel %vm356, %v199, 0
      %486 = vmatprep.subr.bf16.mxu0 0
      %487 = vmatpush1.bf16.msra.mxu0 %v484
      %488 = vmatprep.subr.bf16.mxu0 0
      %489 = vmatpush1.bf16.msra.mxu0 0
      %490 = vmatprep.subr.bf16.mxu0 0
      %491 = vmatpush1.bf16.msra.mxu0 0
      %492 = vmatprep.subr.bf16.mxu0 0
      %493 = vmatpush1.bf16.msra.mxu0 0
      %494 = vmatprep.subr.bf16.mxu0 0
      %495 = vmatpush1.bf16.msra.mxu0 0
      %496 = vmatprep.subr.bf16.mxu0 0
      %497 = vmatpush1.bf16.msra.mxu0 0
      %498 = vmatprep.subr.bf16.mxu0 0
      %499 = vmatpush1.bf16.msra.mxu0 0
      %500 = vmatprep.subr.bf16.mxu0 0
      %501 = vmatpush1.bf16.msra.mxu0 0
      %502 = vmatprep.subr.bf16.mxu0 0
      %503 = vmatpush1.bf16.msra.mxu0 0
      %504 = vmatprep.subr.bf16.mxu0 0
      %505 = vmatpush1.bf16.msra.mxu0 0
      %506 = vmatprep.subr.bf16.mxu0 0
      %507 = vmatpush1.bf16.msra.mxu0 0
      %508 = vmatprep.subr.bf16.mxu0 0
      %509 = vmatpush1.bf16.msra.mxu0 0
      %510 = vmatprep.subr.bf16.mxu0 0
      %511 = vmatpush1.bf16.msra.mxu0 0
      %512 = vmatprep.subr.bf16.mxu0 0
      %513 = vmatpush1.bf16.msra.mxu0 0
      %514 = vmatprep.subr.bf16.mxu0 0
      %515 = vmatpush1.bf16.msra.mxu0 0
      %516 = vmatprep.subr.bf16.mxu0 0
      %517 = vmatpush1.bf16.msra.mxu0 0
      %518 = vmatprep.mubr.bf16.mxu0 0
      %519 = vmatmul.mubr.bf16.gmra.mrb[0].mxu0 %v465
      %v520 = vpop.f32.mrb[0].mxu0
      %v521 = vadd.f32 %v395, %v520
      %v522 = vpop.f32.mrb[0].mxu0
      %v523 = vpop.f32.mrb[0].mxu0
      %v524 = vadd.f32 %v398, %v523
      %v525 = vpop.f32.mrb[0].mxu0
      %526 = vmatprep.mubr.bf16.mxu0 0
      %527 = vmatmul.mubr.bf16.gmra.mrb[0].mxu0 %v467
      %v528 = vpop.f32.mrb[0].mxu0
      %v529 = vadd.f32 %v403, %v528
      %v530 = vpop.f32.mrb[0].mxu0
      %v531 = vpop.f32.mrb[0].mxu0
      %v532 = vadd.f32 %v406, %v531
      %v533 = vpop.f32.mrb[0].mxu0
      %534 = vmatprep.mubr.bf16.mxu0 0
      %535 = vmatmul.mubr.bf16.gmra.mrb[0].mxu0 %v469
      %v536 = vpop.f32.mrb[0].mxu0
      %v537 = vadd.f32 %v411, %v536
      %v538 = vpop.f32.mrb[0].mxu0
      %v539 = vpop.f32.mrb[0].mxu0
      %v540 = vadd.f32 %v414, %v539
      %v541 = vpop.f32.mrb[0].mxu0
      %542 = vmatprep.mubr.bf16.mxu0 0
      %543 = vmatmul.mubr.bf16.gmra.mrb[0].mxu0 %v471
      %v544 = vpop.f32.mrb[0].mxu0
      %v545 = vadd.f32 %v419, %v544
      %v546 = vpop.f32.mrb[0].mxu0
      %v547 = vpop.f32.mrb[0].mxu0
      %v548 = vadd.f32 %v422, %v547
      %v549 = vpop.f32.mrb[0].mxu0
      %550 = vmatprep.mubr.bf16.mxu0 0
      %551 = vmatmul.mubr.bf16.gmra.mrb[0].mxu0 %v473
      %v552 = vpop.f32.mrb[0].mxu0
      %v553 = vadd.f32 %v427, %v552
      %v554 = vpop.f32.mrb[0].mxu0
      %v555 = vpop.f32.mrb[0].mxu0
      %v556 = vadd.f32 %v430, %v555
      %v557 = vpop.f32.mrb[0].mxu0
      %558 = vmatprep.mubr.bf16.mxu0 0
      %559 = vmatmul.mubr.bf16.gmra.mrb[0].mxu0 %v475
      %v560 = vpop.f32.mrb[0].mxu0
      %v561 = vadd.f32 %v435, %v560
      %v562 = vpop.f32.mrb[0].mxu0
      %v563 = vpop.f32.mrb[0].mxu0
      %v564 = vadd.f32 %v438, %v563
      %v565 = vpop.f32.mrb[0].mxu0
      %566 = vmatprep.mubr.bf16.mxu0 0
      %567 = vmatmul.mubr.bf16.gmra.mrb[0].mxu0 %v477
      %v568 = vpop.f32.mrb[0].mxu0
      %v569 = vadd.f32 %v443, %v568
      %v570 = vpop.f32.mrb[0].mxu0
      %v571 = vpop.f32.mrb[0].mxu0
      %v572 = vadd.f32 %v446, %v571
      %v573 = vpop.f32.mrb[0].mxu0
      %574 = vmatprep.mubr.bf16.mxu0 0
      %575 = vmatmul.mubr.bf16.gmra.mrb[0].mxu0 %v479
      %v576 = vpop.f32.mrb[0].mxu0
      %v577 = vadd.f32 %v451, %v576
      %v578 = vpop.f32.mrb[0].mxu0
      %v579 = vpop.f32.mrb[0].mxu0
      %v580 = vadd.f32 %v454, %v579
      %v581 = vpop.f32.mrb[0].mxu0
      %582 = vmatprep.mubr.bf16.mxu0 0
      %583 = vmatmul.mubr.bf16.gmra.mrb[0].mxu0 %v481
      %v584 = vpop.f32.mrb[0].mxu0
      %v585 = vadd.f32 %v459, %v584
      %v586 = vpop.f32.mrb[0].mxu0
      %v587 = vpop.f32.mrb[0].mxu0
      %v588 = vadd.f32 %v462, %v587
      %v589 = vpop.f32.mrb[0].mxu0
      %590 = vdwg.mxu0
      %v591 = vld [vmem:[%s170] sm:$0xe]
      %s592 = scalar_lea.vmem %s1, 8
      %v593 = vld [vmem:[%s592] sm:$0xf]
      %v595 = vunpack.c.l.b16 %v591
      %v596 = vpack.c.b16 %v223, %v595
      %vm597 = vcmask 1046528
      %v598 = vrot.slane %v596, 1
      %v599 = vrot.slane %v242, 1
      %v600 = vsel %vm597, %v598, %v599
      %v601 = vrot.slane %v243, 1
      %v602 = vsel %vm597, %v599, %v601
      %v603 = vrot.slane %v244, 1
      %v604 = vsel %vm597, %v601, %v603
      %v605 = vrot.slane %v245, 1
      %v606 = vsel %vm597, %v603, %v605
      %v607 = vrot.slane %v246, 1
      %v608 = vsel %vm597, %v605, %v607
      %v609 = vrot.slane %v247, 1
      %v610 = vsel %vm597, %v607, %v609
      %v611 = vrot.slane %v248, 1
      %v612 = vsel %vm597, %v609, %v611
      %v613 = vrot.slane %v249, 1
      %v614 = vsel %vm597, %v611, %v613
      %v615 = vrot.slane %v250, 1
      %v616 = vsel %vm597, %v613, %v615
      %v618 = vsel %vm328, %v600, 0
      %v621 = vsel %vm328, %v602, 0
      %v624 = vsel %vm328, %v604, 0
      %v627 = vsel %vm328, %v606, 0
      %v630 = vsel %vm328, %v608, 0
      %v633 = vsel %vm328, %v610, 0
      %v636 = vsel %vm328, %v612, 0
      %v639 = vsel %vm328, %v614, 0
      %v642 = vsel %vm328, %v616, 0
      %v645 = vsel %vm356, %v593, 0
      %647 = vmatprep.subr.bf16.mxu0 0
      %648 = vmatpush1.bf16.msra.mxu0 %v645
      %649 = vmatprep.subr.bf16.mxu0 0
      %650 = vmatpush1.bf16.msra.mxu0 0
      %651 = vmatprep.subr.bf16.mxu0 0
      %652 = vmatpush1.bf16.msra.mxu0 0
      %653 = vmatprep.subr.bf16.mxu0 0
      %654 = vmatpush1.bf16.msra.mxu0 0
      %655 = vmatprep.subr.bf16.mxu0 0
      %656 = vmatpush1.bf16.msra.mxu0 0
      %657 = vmatprep.subr.bf16.mxu0 0
      %658 = vmatpush1.bf16.msra.mxu0 0
      %659 = vmatprep.subr.bf16.mxu0 0
      %660 = vmatpush1.bf16.msra.mxu0 0
      %661 = vmatprep.subr.bf16.mxu0 0
      %662 = vmatpush1.bf16.msra.mxu0 0
      %663 = vmatprep.subr.bf16.mxu0 0
      %664 = vmatpush1.bf16.msra.mxu0 0
      %665 = vmatprep.subr.bf16.mxu0 0
      %666 = vmatpush1.bf16.msra.mxu0 0
      %667 = vmatprep.subr.bf16.mxu0 0
      %668 = vmatpush1.bf16.msra.mxu0 0
      %669 = vmatprep.subr.bf16.mxu0 0
      %670 = vmatpush1.bf16.msra.mxu0 0
      %671 = vmatprep.subr.bf16.mxu0 0
      %672 = vmatpush1.bf16.msra.mxu0 0
      %673 = vmatprep.subr.bf16.mxu0 0
      %674 = vmatpush1.bf16.msra.mxu0 0
      %675 = vmatprep.subr.bf16.mxu0 0
      %676 = vmatpush1.bf16.msra.mxu0 0
      %677 = vmatprep.subr.bf16.mxu0 0
      %678 = vmatpush1.bf16.msra.mxu0 0
      %679 = vmatprep.mubr.bf16.mxu0 0
      %680 = vmatmul.mubr.bf16.gmra.mrb[0].mxu0 %v618
      %v681 = vpop.f32.mrb[0].mxu0
      %v682 = vadd.f32 0.0, %v681
      %v683 = vpop.f32.mrb[0].mxu0
      %v684 = vpop.f32.mrb[0].mxu0
      %v685 = vadd.f32 0.0, %v684
      %v686 = vpop.f32.mrb[0].mxu0
      %687 = vmatprep.mubr.bf16.mxu0 0
      %688 = vmatmul.mubr.bf16.gmra.mrb[0].mxu0 %v621
      %v689 = vpop.f32.mrb[0].mxu0
      %v690 = vadd.f32 0.0, %v689
      %v691 = vpop.f32.mrb[0].mxu0
      %v692 = vpop.f32.mrb[0].mxu0
      %v693 = vadd.f32 0.0, %v692
      %v694 = vpop.f32.mrb[0].mxu0
      %695 = vmatprep.mubr.bf16.mxu0 0
      %696 = vmatmul.mubr.bf16.gmra.mrb[0].mxu0 %v624
      %v697 = vpop.f32.mrb[0].mxu0
      %v698 = vadd.f32 0.0, %v697
      %v699 = vpop.f32.mrb[0].mxu0
      %v700 = vpop.f32.mrb[0].mxu0
      %v701 = vadd.f32 0.0, %v700
      %v702 = vpop.f32.mrb[0].mxu0
      %703 = vmatprep.mubr.bf16.mxu0 0
      %704 = vmatmul.mubr.bf16.gmra.mrb[0].mxu0 %v627
      %v705 = vpop.f32.mrb[0].mxu0
      %v706 = vadd.f32 0.0, %v705
      %v707 = vpop.f32.mrb[0].mxu0
      %v708 = vpop.f32.mrb[0].mxu0
      %v709 = vadd.f32 0.0, %v708
      %v710 = vpop.f32.mrb[0].mxu0
      %711 = vmatprep.mubr.bf16.mxu0 0
      %712 = vmatmul.mubr.bf16.gmra.mrb[0].mxu0 %v630
      %v713 = vpop.f32.mrb[0].mxu0
      %v714 = vadd.f32 0.0, %v713
      %v715 = vpop.f32.mrb[0].mxu0
      %v716 = vpop.f32.mrb[0].mxu0
      %v717 = vadd.f32 0.0, %v716
      %v718 = vpop.f32.mrb[0].mxu0
      %719 = vmatprep.mubr.bf16.mxu0 0
      %720 = vmatmul.mubr.bf16.gmra.mrb[0].mxu0 %v633
      %v721 = vpop.f32.mrb[0].mxu0
      %v722 = vadd.f32 0.0, %v721
      %v723 = vpop.f32.mrb[0].mxu0
      %v724 = vpop.f32.mrb[0].mxu0
      %v725 = vadd.f32 0.0, %v724
      %v726 = vpop.f32.mrb[0].mxu0
      %727 = vmatprep.mubr.bf16.mxu0 0
      %728 = vmatmul.mubr.bf16.gmra.mrb[0].mxu0 %v636
      %v729 = vpop.f32.mrb[0].mxu0
      %v730 = vadd.f32 0.0, %v729
      %v731 = vpop.f32.mrb[0].mxu0
      %v732 = vpop.f32.mrb[0].mxu0
      %v733 = vadd.f32 0.0, %v732
      %v734 = vpop.f32.mrb[0].mxu0
      %735 = vmatprep.mubr.bf16.mxu0 0
      %736 = vmatmul.mubr.bf16.gmra.mrb[0].mxu0 %v639
      %v737 = vpop.f32.mrb[0].mxu0
      %v738 = vadd.f32 0.0, %v737
      %v739 = vpop.f32.mrb[0].mxu0
      %v740 = vpop.f32.mrb[0].mxu0
      %v741 = vadd.f32 0.0, %v740
      %v742 = vpop.f32.mrb[0].mxu0
      %743 = vmatprep.mubr.bf16.mxu0 0
      %744 = vmatmul.mubr.bf16.gmra.mrb[0].mxu0 %v642
      %v745 = vpop.f32.mrb[0].mxu0
      %v746 = vadd.f32 0.0, %v745
      %v747 = vpop.f32.mrb[0].mxu0
      %v748 = vpop.f32.mrb[0].mxu0
      %v749 = vadd.f32 0.0, %v748
      %v750 = vpop.f32.mrb[0].mxu0
      %751 = vdwg.mxu0
      %v752 = vadd.f32 %v521, %v682
      %v753 = vadd.f32 %v524, %v685
      %v754 = vadd.f32 %v529, %v690
      %v755 = vadd.f32 %v532, %v693
      %v756 = vadd.f32 %v537, %v698
      %v757 = vadd.f32 %v540, %v701
      %v758 = vadd.f32 %v545, %v706
      %v759 = vadd.f32 %v548, %v709
      %v760 = vadd.f32 %v553, %v714
      %v761 = vadd.f32 %v556, %v717
      %v762 = vadd.f32 %v561, %v722
      %v763 = vadd.f32 %v564, %v725
      %v764 = vadd.f32 %v569, %v730
      %v765 = vadd.f32 %v572, %v733
      %v766 = vadd.f32 %v577, %v738
      %v767 = vadd.f32 %v580, %v741
      %v768 = vadd.f32 %v585, %v746
      %v769 = vadd.f32 %v588, %v749
      %v770 = vld [vmem:[%s170 + $0x8] sm:$0xe]
      %v771 = vld [vmem:[%s170 + $0xc] sm:$0xf]
      %v772 = vld [vmem:[%s170 + $0x10] sm:$0xf]
      %v773 = vld [vmem:[%s170 + $0x14] sm:$0xf]
      %v774 = vld [vmem:[%s170 + $0x18] sm:$0xf]
      %v775 = vld [vmem:[%s170 + $0x1c] sm:$0xf]
      %v776 = vld [vmem:[%s170 + $0x20] sm:$0xf]
      %v777 = vld [vmem:[%s170 + $0x24] sm:$0xf]
      %v778 = vld [vmem:[%s170 + $0x28] sm:$0xf]
      %v779 = vld [vmem:[%s170 + $0x2c] sm:$0xf]
      %v780 = vld [vmem:[%s170 + $0x30] sm:$0xf]
      %v781 = vld [vmem:[%s170 + $0x34] sm:$0xf]
      %v782 = vld [vmem:[%s170 + $0x38] sm:$0xf]
      %v783 = vld [vmem:[%s170 + $0x3c] sm:$0xf]
      %v784 = vld [vmem:[%s170 + $0x40] sm:$0xf]
      %v785 = vld [vmem:[%s170 + $0x44] sm:$0xf]
      %v786 = vld [vmem:[%s170 + $0x48] sm:$0xf]
      %v787 = vld [vmem:[%s170 + $0x4c] sm:$0xf]
      %v788 = vld [vmem:[%s170 + $0x50] sm:$0x1]
      %s789 = scalar_lea.vmem %s1, 12
      %v790 = vld [vmem:[%s789] sm:$0xf]
      %v810 = vunpack.c.l.b16 %v770
      %v811 = vunpack.c.l.b16 %v771
      %v812 = vunpack.c.l.b16 %v772
      %v813 = vunpack.c.l.b16 %v773
      %v814 = vunpack.c.l.b16 %v774
      %v815 = vunpack.c.l.b16 %v775
      %v816 = vunpack.c.l.b16 %v776
      %v817 = vunpack.c.l.b16 %v777
      %v818 = vunpack.c.l.b16 %v778
      %v819 = vunpack.c.l.b16 %v779
      %v820 = vunpack.c.l.b16 %v780
      %v821 = vunpack.c.l.b16 %v781
      %v822 = vunpack.c.l.b16 %v782
      %v823 = vunpack.c.l.b16 %v783
      %v824 = vunpack.c.l.b16 %v784
      %v825 = vunpack.c.l.b16 %v785
      %v826 = vunpack.c.l.b16 %v786
      %v827 = vunpack.c.l.b16 %v787
      %v828 = vunpack.c.l.b16 %v788
      %v829 = vpack.c.b16 %v811, %v810
      %v830 = vpack.c.b16 %v813, %v812
      %v831 = vpack.c.b16 %v815, %v814
      %v832 = vpack.c.b16 %v817, %v816
      %v833 = vpack.c.b16 %v819, %v818
      %v834 = vpack.c.b16 %v821, %v820
      %v835 = vpack.c.b16 %v823, %v822
      %v836 = vpack.c.b16 %v825, %v824
      %v837 = vpack.c.b16 %v827, %v826
      %v838 = vpack.c.b16 %v828, %v828
      %v839 = vrot.slane %v829, 1
      %v840 = vrot.slane %v830, 1
      %v841 = vsel %vm597, %v839, %v840
      %v842 = vrot.slane %v831, 1
      %v843 = vsel %vm597, %v840, %v842
      %v844 = vrot.slane %v832, 1
      %v845 = vsel %vm597, %v842, %v844
      %v846 = vrot.slane %v833, 1
      %v847 = vsel %vm597, %v844, %v846
      %v848 = vrot.slane %v834, 1
      %v849 = vsel %vm597, %v846, %v848
      %v850 = vrot.slane %v835, 1
      %v851 = vsel %vm597, %v848, %v850
      %v852 = vrot.slane %v836, 1
      %v853 = vsel %vm597, %v850, %v852
      %v854 = vrot.slane %v837, 1
      %v855 = vsel %vm597, %v852, %v854
      %v856 = vrot.slane %v838, 1
      %v857 = vsel %vm597, %v854, %v856
      %v859 = vsel %vm328, %v841, 0
      %v862 = vsel %vm328, %v843, 0
      %v865 = vsel %vm328, %v845, 0
      %v868 = vsel %vm328, %v847, 0
      %v871 = vsel %vm328, %v849, 0
      %v874 = vsel %vm328, %v851, 0
      %v877 = vsel %vm328, %v853, 0
      %v880 = vsel %vm328, %v855, 0
      %v883 = vsel %vm328, %v857, 0
      %v886 = vsel %vm356, %v790, 0
      %888 = vmatprep.subr.bf16.mxu0 0
      %889 = vmatpush1.bf16.msra.mxu0 %v886
      %890 = vmatprep.subr.bf16.mxu0 0
      %891 = vmatpush1.bf16.msra.mxu0 0
      %892 = vmatprep.subr.bf16.mxu0 0
      %893 = vmatpush1.bf16.msra.mxu0 0
      %894 = vmatprep.subr.bf16.mxu0 0
      %895 = vmatpush1.bf16.msra.mxu0 0
      %896 = vmatprep.subr.bf16.mxu0 0
      %897 = vmatpush1.bf16.msra.mxu0 0
      %898 = vmatprep.subr.bf16.mxu0 0
      %899 = vmatpush1.bf16.msra.mxu0 0
      %900 = vmatprep.subr.bf16.mxu0 0
      %901 = vmatpush1.bf16.msra.mxu0 0
      %902 = vmatprep.subr.bf16.mxu0 0
      %903 = vmatpush1.bf16.msra.mxu0 0
      %904 = vmatprep.subr.bf16.mxu0 0
      %905 = vmatpush1.bf16.msra.mxu0 0
      %906 = vmatprep.subr.bf16.mxu0 0
      %907 = vmatpush1.bf16.msra.mxu0 0
      %908 = vmatprep.subr.bf16.mxu0 0
      %909 = vmatpush1.bf16.msra.mxu0 0
      %910 = vmatprep.subr.bf16.mxu0 0
      %911 = vmatpush1.bf16.msra.mxu0 0
      %912 = vmatprep.subr.bf16.mxu0 0
      %913 = vmatpush1.bf16.msra.mxu0 0
      %914 = vmatprep.subr.bf16.mxu0 0
      %915 = vmatpush1.bf16.msra.mxu0 0
      %916 = vmatprep.subr.bf16.mxu0 0
      %917 = vmatpush1.bf16.msra.mxu0 0
      %918 = vmatprep.subr.bf16.mxu0 0
      %919 = vmatpush1.bf16.msra.mxu0 0
      %920 = vmatprep.mubr.bf16.mxu0 0
      %921 = vmatmul.mubr.bf16.gmra.mrb[0].mxu0 %v859
      %v922 = vpop.f32.mrb[0].mxu0
      %v923 = vadd.f32 0.0, %v922
      %v924 = vpop.f32.mrb[0].mxu0
      %v925 = vpop.f32.mrb[0].mxu0
      %v926 = vadd.f32 0.0, %v925
      %v927 = vpop.f32.mrb[0].mxu0
      %928 = vmatprep.mubr.bf16.mxu0 0
      %929 = vmatmul.mubr.bf16.gmra.mrb[0].mxu0 %v862
      %v930 = vpop.f32.mrb[0].mxu0
      %v931 = vadd.f32 0.0, %v930
      %v932 = vpop.f32.mrb[0].mxu0
      %v933 = vpop.f32.mrb[0].mxu0
      %v934 = vadd.f32 0.0, %v933
      %v935 = vpop.f32.mrb[0].mxu0
      %936 = vmatprep.mubr.bf16.mxu0 0
      %937 = vmatmul.mubr.bf16.gmra.mrb[0].mxu0 %v865
      %v938 = vpop.f32.mrb[0].mxu0
      %v939 = vadd.f32 0.0, %v938
      %v940 = vpop.f32.mrb[0].mxu0
      %v941 = vpop.f32.mrb[0].mxu0
      %v942 = vadd.f32 0.0, %v941
      %v943 = vpop.f32.mrb[0].mxu0
      %944 = vmatprep.mubr.bf16.mxu0 0
      %945 = vmatmul.mubr.bf16.gmra.mrb[0].mxu0 %v868
      %v946 = vpop.f32.mrb[0].mxu0
      %v947 = vadd.f32 0.0, %v946
      %v948 = vpop.f32.mrb[0].mxu0
      %v949 = vpop.f32.mrb[0].mxu0
      %v950 = vadd.f32 0.0, %v949
      %v951 = vpop.f32.mrb[0].mxu0
      %952 = vmatprep.mubr.bf16.mxu0 0
      %953 = vmatmul.mubr.bf16.gmra.mrb[0].mxu0 %v871
      %v954 = vpop.f32.mrb[0].mxu0
      %v955 = vadd.f32 0.0, %v954
      %v956 = vpop.f32.mrb[0].mxu0
      %v957 = vpop.f32.mrb[0].mxu0
      %v958 = vadd.f32 0.0, %v957
      %v959 = vpop.f32.mrb[0].mxu0
      %960 = vmatprep.mubr.bf16.mxu0 0
      %961 = vmatmul.mubr.bf16.gmra.mrb[0].mxu0 %v874
      %v962 = vpop.f32.mrb[0].mxu0
      %v963 = vadd.f32 0.0, %v962
      %v964 = vpop.f32.mrb[0].mxu0
      %v965 = vpop.f32.mrb[0].mxu0
      %v966 = vadd.f32 0.0, %v965
      %v967 = vpop.f32.mrb[0].mxu0
      %968 = vmatprep.mubr.bf16.mxu0 0
      %969 = vmatmul.mubr.bf16.gmra.mrb[0].mxu0 %v877
      %v970 = vpop.f32.mrb[0].mxu0
      %v971 = vadd.f32 0.0, %v970
      %v972 = vpop.f32.mrb[0].mxu0
      %v973 = vpop.f32.mrb[0].mxu0
      %v974 = vadd.f32 0.0, %v973
      %v975 = vpop.f32.mrb[0].mxu0
      %976 = vmatprep.mubr.bf16.mxu0 0
      %977 = vmatmul.mubr.bf16.gmra.mrb[0].mxu0 %v880
      %v978 = vpop.f32.mrb[0].mxu0
      %v979 = vadd.f32 0.0, %v978
      %v980 = vpop.f32.mrb[0].mxu0
      %v981 = vpop.f32.mrb[0].mxu0
      %v982 = vadd.f32 0.0, %v981
      %v983 = vpop.f32.mrb[0].mxu0
      %984 = vmatprep.mubr.bf16.mxu0 0
      %985 = vmatmul.mubr.bf16.gmra.mrb[0].mxu0 %v883
      %v986 = vpop.f32.mrb[0].mxu0
      %v987 = vadd.f32 0.0, %v986
      %v988 = vpop.f32.mrb[0].mxu0
      %v989 = vpop.f32.mrb[0].mxu0
      %v990 = vadd.f32 0.0, %v989
      %v991 = vpop.f32.mrb[0].mxu0
      %992 = vdwg.mxu0
      %v993 = vadd.f32 %v752, %v923
      %v994 = vadd.f32 %v753, %v926
      %v995 = vadd.f32 %v754, %v931
      %v996 = vadd.f32 %v755, %v934
      %v997 = vadd.f32 %v756, %v939
      %v998 = vadd.f32 %v757, %v942
      %v999 = vadd.f32 %v758, %v947
      %v1000 = vadd.f32 %v759, %v950
      %v1001 = vadd.f32 %v760, %v955
      %v1002 = vadd.f32 %v761, %v958
      %v1003 = vadd.f32 %v762, %v963
      %v1004 = vadd.f32 %v763, %v966
      %v1005 = vadd.f32 %v764, %v971
      %v1006 = vadd.f32 %v765, %v974
      %v1007 = vadd.f32 %v766, %v979
      %v1008 = vadd.f32 %v767, %v982
      %v1009 = vadd.f32 %v768, %v987
      %v1010 = vadd.f32 %v769, %v990
      %v1011 = vld [vmem:[%s170 + $0x50] sm:$0x3]
      %s1012 = scalar_lea.vmem %s1, 16
      %v1013 = vld [vmem:[%s1012] sm:$0xf]
      %v1015 = vunpack.c.l.b16 %v1011
      %v1016 = vpack.c.b16 %v1015, %v1015
      %vm1017 = vsmask.f32 6400
      %v1019 = vshrl.u32 %v829, 16
      %v1021 = vrot.slane %v1019, 1
      %v1022 = vshll.u32 %v829, 16
      %v1024 = vrot.slane %v1022, 2
      %v1025 = vor.u32 %v1021, %v1024
      %v1027 = vshrl.u32 %v830, 16
      %v1029 = vrot.slane %v1027, 1
      %v1030 = vshll.u32 %v830, 16
      %v1032 = vrot.slane %v1030, 2
      %v1033 = vor.u32 %v1029, %v1032
      %v1034 = vsel %vm1017, %v1025, %v1033
      %v1036 = vshrl.u32 %v831, 16
      %v1038 = vrot.slane %v1036, 1
      %v1039 = vshll.u32 %v831, 16
      %v1041 = vrot.slane %v1039, 2
      %v1042 = vor.u32 %v1038, %v1041
      %v1043 = vsel %vm1017, %v1033, %v1042
      %v1045 = vshrl.u32 %v832, 16
      %v1047 = vrot.slane %v1045, 1
      %v1048 = vshll.u32 %v832, 16
      %v1050 = vrot.slane %v1048, 2
      %v1051 = vor.u32 %v1047, %v1050
      %v1052 = vsel %vm1017, %v1042, %v1051
      %v1054 = vshrl.u32 %v833, 16
      %v1056 = vrot.slane %v1054, 1
      %v1057 = vshll.u32 %v833, 16
      %v1059 = vrot.slane %v1057, 2
      %v1060 = vor.u32 %v1056, %v1059
      %v1061 = vsel %vm1017, %v1051, %v1060
      %v1063 = vshrl.u32 %v834, 16
      %v1065 = vrot.slane %v1063, 1
      %v1066 = vshll.u32 %v834, 16
      %v1068 = vrot.slane %v1066, 2
      %v1069 = vor.u32 %v1065, %v1068
      %v1070 = vsel %vm1017, %v1060, %v1069
      %v1072 = vshrl.u32 %v835, 16
      %v1074 = vrot.slane %v1072, 1
      %v1075 = vshll.u32 %v835, 16
      %v1077 = vrot.slane %v1075, 2
      %v1078 = vor.u32 %v1074, %v1077
      %v1079 = vsel %vm1017, %v1069, %v1078
      %v1081 = vshrl.u32 %v836, 16
      %v1083 = vrot.slane %v1081, 1
      %v1084 = vshll.u32 %v836, 16
      %v1086 = vrot.slane %v1084, 2
      %v1087 = vor.u32 %v1083, %v1086
      %v1088 = vsel %vm1017, %v1078, %v1087
      %v1090 = vshrl.u32 %v837, 16
      %v1092 = vrot.slane %v1090, 1
      %v1093 = vshll.u32 %v837, 16
      %v1095 = vrot.slane %v1093, 2
      %v1096 = vor.u32 %v1092, %v1095
      %v1097 = vsel %vm1017, %v1087, %v1096
      %v1099 = vshrl.u32 %v1016, 16
      %v1101 = vrot.slane %v1099, 1
      %v1102 = vshll.u32 %v1016, 16
      %v1104 = vrot.slane %v1102, 2
      %v1105 = vor.u32 %v1101, %v1104
      %v1106 = vsel %vm1017, %v1096, %v1105
      %v1108 = vsel %vm328, %v1034, 0
      %v1111 = vsel %vm328, %v1043, 0
      %v1114 = vsel %vm328, %v1052, 0
      %v1117 = vsel %vm328, %v1061, 0
      %v1120 = vsel %vm328, %v1070, 0
      %v1123 = vsel %vm328, %v1079, 0
      %v1126 = vsel %vm328, %v1088, 0
      %v1129 = vsel %vm328, %v1097, 0
      %v1132 = vsel %vm328, %v1106, 0
      %v1135 = vsel %vm356, %v1013, 0
      %1137 = vmatprep.subr.bf16.mxu0 0
      %1138 = vmatpush1.bf16.msra.mxu0 %v1135
      %1139 = vmatprep.subr.bf16.mxu0 0
      %1140 = vmatpush1.bf16.msra.mxu0 0
      %1141 = vmatprep.subr.bf16.mxu0 0
      %1142 = vmatpush1.bf16.msra.mxu0 0
      %1143 = vmatprep.subr.bf16.mxu0 0
      %1144 = vmatpush1.bf16.msra.mxu0 0
      %1145 = vmatprep.subr.bf16.mxu0 0
      %1146 = vmatpush1.bf16.msra.mxu0 0
      %1147 = vmatprep.subr.bf16.mxu0 0
      %1148 = vmatpush1.bf16.msra.mxu0 0
      %1149 = vmatprep.subr.bf16.mxu0 0
      %1150 = vmatpush1.bf16.msra.mxu0 0
      %1151 = vmatprep.subr.bf16.mxu0 0
      %1152 = vmatpush1.bf16.msra.mxu0 0
      %1153 = vmatprep.subr.bf16.mxu0 0
      %1154 = vmatpush1.bf16.msra.mxu0 0
      %1155 = vmatprep.subr.bf16.mxu0 0
      %1156 = vmatpush1.bf16.msra.mxu0 0
      %1157 = vmatprep.subr.bf16.mxu0 0
      %1158 = vmatpush1.bf16.msra.mxu0 0
      %1159 = vmatprep.subr.bf16.mxu0 0
      %1160 = vmatpush1.bf16.msra.mxu0 0
      %1161 = vmatprep.subr.bf16.mxu0 0
      %1162 = vmatpush1.bf16.msra.mxu0 0
      %1163 = vmatprep.subr.bf16.mxu0 0
      %1164 = vmatpush1.bf16.msra.mxu0 0
      %1165 = vmatprep.subr.bf16.mxu0 0
      %1166 = vmatpush1.bf16.msra.mxu0 0
      %1167 = vmatprep.subr.bf16.mxu0 0
      %1168 = vmatpush1.bf16.msra.mxu0 0
      %1169 = vmatprep.mubr.bf16.mxu0 0
      %1170 = vmatmul.mubr.bf16.gmra.mrb[0].mxu0 %v1108
      %v1171 = vpop.f32.mrb[0].mxu0
      %v1172 = vadd.f32 0.0, %v1171
      %v1173 = vpop.f32.mrb[0].mxu0
      %v1174 = vpop.f32.mrb[0].mxu0
      %v1175 = vadd.f32 0.0, %v1174
      %v1176 = vpop.f32.mrb[0].mxu0
      %1177 = vmatprep.mubr.bf16.mxu0 0
      %1178 = vmatmul.mubr.bf16.gmra.mrb[0].mxu0 %v1111
      %v1179 = vpop.f32.mrb[0].mxu0
      %v1180 = vadd.f32 0.0, %v1179
      %v1181 = vpop.f32.mrb[0].mxu0
      %v1182 = vpop.f32.mrb[0].mxu0
      %v1183 = vadd.f32 0.0, %v1182
      %v1184 = vpop.f32.mrb[0].mxu0
      %1185 = vmatprep.mubr.bf16.mxu0 0
      %1186 = vmatmul.mubr.bf16.gmra.mrb[0].mxu0 %v1114
      %v1187 = vpop.f32.mrb[0].mxu0
      %v1188 = vadd.f32 0.0, %v1187
      %v1189 = vpop.f32.mrb[0].mxu0
      %v1190 = vpop.f32.mrb[0].mxu0
      %v1191 = vadd.f32 0.0, %v1190
      %v1192 = vpop.f32.mrb[0].mxu0
      %1193 = vmatprep.mubr.bf16.mxu0 0
      %1194 = vmatmul.mubr.bf16.gmra.mrb[0].mxu0 %v1117
      %v1195 = vpop.f32.mrb[0].mxu0
      %v1196 = vadd.f32 0.0, %v1195
      %v1197 = vpop.f32.mrb[0].mxu0
      %v1198 = vpop.f32.mrb[0].mxu0
      %v1199 = vadd.f32 0.0, %v1198
      %v1200 = vpop.f32.mrb[0].mxu0
      %1201 = vmatprep.mubr.bf16.mxu0 0
      %1202 = vmatmul.mubr.bf16.gmra.mrb[0].mxu0 %v1120
      %v1203 = vpop.f32.mrb[0].mxu0
      %v1204 = vadd.f32 0.0, %v1203
      %v1205 = vpop.f32.mrb[0].mxu0
      %v1206 = vpop.f32.mrb[0].mxu0
      %v1207 = vadd.f32 0.0, %v1206
      %v1208 = vpop.f32.mrb[0].mxu0
      %1209 = vmatprep.mubr.bf16.mxu0 0
      %1210 = vmatmul.mubr.bf16.gmra.mrb[0].mxu0 %v1123
      %v1211 = vpop.f32.mrb[0].mxu0
      %v1212 = vadd.f32 0.0, %v1211
      %v1213 = vpop.f32.mrb[0].mxu0
      %v1214 = vpop.f32.mrb[0].mxu0
      %v1215 = vadd.f32 0.0, %v1214
      %v1216 = vpop.f32.mrb[0].mxu0
      %1217 = vmatprep.mubr.bf16.mxu0 0
      %1218 = vmatmul.mubr.bf16.gmra.mrb[0].mxu0 %v1126
      %v1219 = vpop.f32.mrb[0].mxu0
      %v1220 = vadd.f32 0.0, %v1219
      %v1221 = vpop.f32.mrb[0].mxu0
      %v1222 = vpop.f32.mrb[0].mxu0
      %v1223 = vadd.f32 0.0, %v1222
      %v1224 = vpop.f32.mrb[0].mxu0
      %1225 = vmatprep.mubr.bf16.mxu0 0
      %1226 = vmatmul.mubr.bf16.gmra.mrb[0].mxu0 %v1129
      %v1227 = vpop.f32.mrb[0].mxu0
      %v1228 = vadd.f32 0.0, %v1227
      %v1229 = vpop.f32.mrb[0].mxu0
      %v1230 = vpop.f32.mrb[0].mxu0
      %v1231 = vadd.f32 0.0, %v1230
      %v1232 = vpop.f32.mrb[0].mxu0
      %1233 = vmatprep.mubr.bf16.mxu0 0
      %1234 = vmatmul.mubr.bf16.gmra.mrb[0].mxu0 %v1132
      %v1235 = vpop.f32.mrb[0].mxu0
      %v1236 = vadd.f32 0.0, %v1235
      %v1237 = vpop.f32.mrb[0].mxu0
      %v1238 = vpop.f32.mrb[0].mxu0
      %v1239 = vadd.f32 0.0, %v1238
      %v1240 = vpop.f32.mrb[0].mxu0
      %1241 = vdwg.mxu0
      %v1242 = vadd.f32 %v993, %v1172
      %v1243 = vadd.f32 %v994, %v1175
      %v1244 = vadd.f32 %v995, %v1180
      %v1245 = vadd.f32 %v996, %v1183
      %v1246 = vadd.f32 %v997, %v1188
      %v1247 = vadd.f32 %v998, %v1191
      %v1248 = vadd.f32 %v999, %v1196
      %v1249 = vadd.f32 %v1000, %v1199
      %v1250 = vadd.f32 %v1001, %v1204
      %v1251 = vadd.f32 %v1002, %v1207
      %v1252 = vadd.f32 %v1003, %v1212
      %v1253 = vadd.f32 %v1004, %v1215
      %v1254 = vadd.f32 %v1005, %v1220
      %v1255 = vadd.f32 %v1006, %v1223
      %v1256 = vadd.f32 %v1007, %v1228
      %v1257 = vadd.f32 %v1008, %v1231
      %v1258 = vadd.f32 %v1009, %v1236
      %v1259 = vadd.f32 %v1010, %v1239
      %v1260 = vld [vmem:[%s170 + $0x8] sm:$0xc]
      %s1261 = scalar_lea.vmem %s1, 20
      %v1262 = vld [vmem:[%s1261] sm:$0xf]
      %v1264 = vunpack.c.l.b16 %v1260
      %v1265 = vpack.c.b16 %v811, %v1264
      %vm1266 = vcmask 1045504
      %v1267 = vrot.slane %v1265, 2
      %v1268 = vrot.slane %v830, 2
      %v1269 = vsel %vm1266, %v1267, %v1268
      %v1270 = vrot.slane %v831, 2
      %v1271 = vsel %vm1266, %v1268, %v1270
      %v1272 = vrot.slane %v832, 2
      %v1273 = vsel %vm1266, %v1270, %v1272
      %v1274 = vrot.slane %v833, 2
      %v1275 = vsel %vm1266, %v1272, %v1274
      %v1276 = vrot.slane %v834, 2
      %v1277 = vsel %vm1266, %v1274, %v1276
      %v1278 = vrot.slane %v835, 2
      %v1279 = vsel %vm1266, %v1276, %v1278
      %v1280 = vrot.slane %v836, 2
      %v1281 = vsel %vm1266, %v1278, %v1280
      %v1282 = vrot.slane %v837, 2
      %v1283 = vsel %vm1266, %v1280, %v1282
      %v1284 = vrot.slane %v1016, 2
      %v1285 = vsel %vm1266, %v1282, %v1284
      %v1287 = vsel %vm328, %v1269, 0
      %v1290 = vsel %vm328, %v1271, 0
      %v1293 = vsel %vm328, %v1273, 0
      %v1296 = vsel %vm328, %v1275, 0
      %v1299 = vsel %vm328, %v1277, 0
      %v1302 = vsel %vm328, %v1279, 0
      %v1305 = vsel %vm328, %v1281, 0
      %v1308 = vsel %vm328, %v1283, 0
      %v1311 = vsel %vm328, %v1285, 0
      %v1314 = vsel %vm356, %v1262, 0
      %1316 = vmatprep.subr.bf16.mxu0 0
      %1317 = vmatpush1.bf16.msra.mxu0 %v1314
      %1318 = vmatprep.subr.bf16.mxu0 0
      %1319 = vmatpush1.bf16.msra.mxu0 0
      %1320 = vmatprep.subr.bf16.mxu0 0
      %1321 = vmatpush1.bf16.msra.mxu0 0
      %1322 = vmatprep.subr.bf16.mxu0 0
      %1323 = vmatpush1.bf16.msra.mxu0 0
      %1324 = vmatprep.subr.bf16.mxu0 0
      %1325 = vmatpush1.bf16.msra.mxu0 0
      %1326 = vmatprep.subr.bf16.mxu0 0
      %1327 = vmatpush1.bf16.msra.mxu0 0
      %1328 = vmatprep.subr.bf16.mxu0 0
      %1329 = vmatpush1.bf16.msra.mxu0 0
      %1330 = vmatprep.subr.bf16.mxu0 0
      %1331 = vmatpush1.bf16.msra.mxu0 0
      %1332 = vmatprep.subr.bf16.mxu0 0
      %1333 = vmatpush1.bf16.msra.mxu0 0
      %1334 = vmatprep.subr.bf16.mxu0 0
      %1335 = vmatpush1.bf16.msra.mxu0 0
      %1336 = vmatprep.subr.bf16.mxu0 0
      %1337 = vmatpush1.bf16.msra.mxu0 0
      %1338 = vmatprep.subr.bf16.mxu0 0
      %1339 = vmatpush1.bf16.msra.mxu0 0
      %1340 = vmatprep.subr.bf16.mxu0 0
      %1341 = vmatpush1.bf16.msra.mxu0 0
      %1342 = vmatprep.subr.bf16.mxu0 0
      %1343 = vmatpush1.bf16.msra.mxu0 0
      %1344 = vmatprep.subr.bf16.mxu0 0
      %1345 = vmatpush1.bf16.msra.mxu0 0
      %1346 = vmatprep.subr.bf16.mxu0 0
      %1347 = vmatpush1.bf16.msra.mxu0 0
      %1348 = vmatprep.mubr.bf16.mxu0 0
      %1349 = vmatmul.mubr.bf16.gmra.mrb[0].mxu0 %v1287
      %v1350 = vpop.f32.mrb[0].mxu0
      %v1351 = vadd.f32 0.0, %v1350
      %v1352 = vpop.f32.mrb[0].mxu0
      %v1353 = vpop.f32.mrb[0].mxu0
      %v1354 = vadd.f32 0.0, %v1353
      %v1355 = vpop.f32.mrb[0].mxu0
      %1356 = vmatprep.mubr.bf16.mxu0 0
      %1357 = vmatmul.mubr.bf16.gmra.mrb[0].mxu0 %v1290
      %v1358 = vpop.f32.mrb[0].mxu0
      %v1359 = vadd.f32 0.0, %v1358
      %v1360 = vpop.f32.mrb[0].mxu0
      %v1361 = vpop.f32.mrb[0].mxu0
      %v1362 = vadd.f32 0.0, %v1361
      %v1363 = vpop.f32.mrb[0].mxu0
      %1364 = vmatprep.mubr.bf16.mxu0 0
      %1365 = vmatmul.mubr.bf16.gmra.mrb[0].mxu0 %v1293
      %v1366 = vpop.f32.mrb[0].mxu0
      %v1367 = vadd.f32 0.0, %v1366
      %v1368 = vpop.f32.mrb[0].mxu0
      %v1369 = vpop.f32.mrb[0].mxu0
      %v1370 = vadd.f32 0.0, %v1369
      %v1371 = vpop.f32.mrb[0].mxu0
      %1372 = vmatprep.mubr.bf16.mxu0 0
      %1373 = vmatmul.mubr.bf16.gmra.mrb[0].mxu0 %v1296
      %v1374 = vpop.f32.mrb[0].mxu0
      %v1375 = vadd.f32 0.0, %v1374
      %v1376 = vpop.f32.mrb[0].mxu0
      %v1377 = vpop.f32.mrb[0].mxu0
      %v1378 = vadd.f32 0.0, %v1377
      %v1379 = vpop.f32.mrb[0].mxu0
      %1380 = vmatprep.mubr.bf16.mxu0 0
      %1381 = vmatmul.mubr.bf16.gmra.mrb[0].mxu0 %v1299
      %v1382 = vpop.f32.mrb[0].mxu0
      %v1383 = vadd.f32 0.0, %v1382
      %v1384 = vpop.f32.mrb[0].mxu0
      %v1385 = vpop.f32.mrb[0].mxu0
      %v1386 = vadd.f32 0.0, %v1385
      %v1387 = vpop.f32.mrb[0].mxu0
      %1388 = vmatprep.mubr.bf16.mxu0 0
      %1389 = vmatmul.mubr.bf16.gmra.mrb[0].mxu0 %v1302
      %v1390 = vpop.f32.mrb[0].mxu0
      %v1391 = vadd.f32 0.0, %v1390
      %v1392 = vpop.f32.mrb[0].mxu0
      %v1393 = vpop.f32.mrb[0].mxu0
      %v1394 = vadd.f32 0.0, %v1393
      %v1395 = vpop.f32.mrb[0].mxu0
      %1396 = vmatprep.mubr.bf16.mxu0 0
      %1397 = vmatmul.mubr.bf16.gmra.mrb[0].mxu0 %v1305
      %v1398 = vpop.f32.mrb[0].mxu0
      %v1399 = vadd.f32 0.0, %v1398
      %v1400 = vpop.f32.mrb[0].mxu0
      %v1401 = vpop.f32.mrb[0].mxu0
      %v1402 = vadd.f32 0.0, %v1401
      %v1403 = vpop.f32.mrb[0].mxu0
      %1404 = vmatprep.mubr.bf16.mxu0 0
      %1405 = vmatmul.mubr.bf16.gmra.mrb[0].mxu0 %v1308
      %v1406 = vpop.f32.mrb[0].mxu0
      %v1407 = vadd.f32 0.0, %v1406
      %v1408 = vpop.f32.mrb[0].mxu0
      %v1409 = vpop.f32.mrb[0].mxu0
      %v1410 = vadd.f32 0.0, %v1409
      %v1411 = vpop.f32.mrb[0].mxu0
      %1412 = vmatprep.mubr.bf16.mxu0 0
      %1413 = vmatmul.mubr.bf16.gmra.mrb[0].mxu0 %v1311
      %v1414 = vpop.f32.mrb[0].mxu0
      %v1415 = vadd.f32 0.0, %v1414
      %v1416 = vpop.f32.mrb[0].mxu0
      %v1417 = vpop.f32.mrb[0].mxu0
      %v1418 = vadd.f32 0.0, %v1417
      %v1419 = vpop.f32.mrb[0].mxu0
      %1420 = vdwg.mxu0
      %v1421 = vadd.f32 %v1242, %v1351
      %v1422 = vadd.f32 %v1243, %v1354
      %v1423 = vadd.f32 %v1244, %v1359
      %v1424 = vadd.f32 %v1245, %v1362
      %v1425 = vadd.f32 %v1246, %v1367
      %v1426 = vadd.f32 %v1247, %v1370
      %v1427 = vadd.f32 %v1248, %v1375
      %v1428 = vadd.f32 %v1249, %v1378
      %v1429 = vadd.f32 %v1250, %v1383
      %v1430 = vadd.f32 %v1251, %v1386
      %v1431 = vadd.f32 %v1252, %v1391
      %v1432 = vadd.f32 %v1253, %v1394
      %v1433 = vadd.f32 %v1254, %v1399
      %v1434 = vadd.f32 %v1255, %v1402
      %v1435 = vadd.f32 %v1256, %v1407
      %v1436 = vadd.f32 %v1257, %v1410
      %v1437 = vadd.f32 %v1258, %v1415
      %v1438 = vadd.f32 %v1259, %v1418
      %v1439 = vld [vmem:[%s170 + $0x10] sm:$0xc]
      %v1440 = vld [vmem:[%s170 + $0x14] sm:$0xf]
      %v1441 = vld [vmem:[%s170 + $0x18] sm:$0xf]
      %v1442 = vld [vmem:[%s170 + $0x1c] sm:$0xf]
      %v1443 = vld [vmem:[%s170 + $0x20] sm:$0xf]
      %v1444 = vld [vmem:[%s170 + $0x24] sm:$0xf]
      %v1445 = vld [vmem:[%s170 + $0x28] sm:$0xf]
      %v1446 = vld [vmem:[%s170 + $0x2c] sm:$0xf]
      %v1447 = vld [vmem:[%s170 + $0x30] sm:$0xf]
      %v1448 = vld [vmem:[%s170 + $0x34] sm:$0xf]
      %v1449 = vld [vmem:[%s170 + $0x38] sm:$0xf]
      %v1450 = vld [vmem:[%s170 + $0x3c] sm:$0xf]
      %v1451 = vld [vmem:[%s170 + $0x40] sm:$0xf]
      %v1452 = vld [vmem:[%s170 + $0x44] sm:$0xf]
      %v1453 = vld [vmem:[%s170 + $0x48] sm:$0xf]
      %v1454 = vld [vmem:[%s170 + $0x4c] sm:$0xf]
      %v1455 = vld [vmem:[%s170 + $0x50] sm:$0xf]
      %v1456 = vld [vmem:[%s170 + $0x54] sm:$0xf]
      %v1457 = vld [vmem:[%s170 + $0x58] sm:$0x3]
      %s1458 = scalar_lea.vmem %s1, 24
      %v1459 = vld [vmem:[%s1458] sm:$0xf]
      %v1479 = vunpack.c.l.b16 %v1439
      %v1480 = vunpack.c.l.b16 %v1440
      %v1481 = vunpack.c.l.b16 %v1441
      %v1482 = vunpack.c.l.b16 %v1442
      %v1483 = vunpack.c.l.b16 %v1443
      %v1484 = vunpack.c.l.b16 %v1444
      %v1485 = vunpack.c.l.b16 %v1445
      %v1486 = vunpack.c.l.b16 %v1446
      %v1487 = vunpack.c.l.b16 %v1447
      %v1488 = vunpack.c.l.b16 %v1448
      %v1489 = vunpack.c.l.b16 %v1449
      %v1490 = vunpack.c.l.b16 %v1450
      %v1491 = vunpack.c.l.b16 %v1451
      %v1492 = vunpack.c.l.b16 %v1452
      %v1493 = vunpack.c.l.b16 %v1453
      %v1494 = vunpack.c.l.b16 %v1454
      %v1495 = vunpack.c.l.b16 %v1455
      %v1496 = vunpack.c.l.b16 %v1456
      %v1497 = vunpack.c.l.b16 %v1457
      %v1498 = vpack.c.b16 %v1480, %v1479
      %v1499 = vpack.c.b16 %v1482, %v1481
      %v1500 = vpack.c.b16 %v1484, %v1483
      %v1501 = vpack.c.b16 %v1486, %v1485
      %v1502 = vpack.c.b16 %v1488, %v1487
      %v1503 = vpack.c.b16 %v1490, %v1489
      %v1504 = vpack.c.b16 %v1492, %v1491
      %v1505 = vpack.c.b16 %v1494, %v1493
      %v1506 = vpack.c.b16 %v1496, %v1495
      %v1507 = vpack.c.b16 %v1497, %v1497
      %v1508 = vrot.slane %v1498, 2
      %v1509 = vrot.slane %v1499, 2
      %v1510 = vsel %vm1266, %v1508, %v1509
      %v1511 = vrot.slane %v1500, 2
      %v1512 = vsel %vm1266, %v1509, %v1511
      %v1513 = vrot.slane %v1501, 2
      %v1514 = vsel %vm1266, %v1511, %v1513
      %v1515 = vrot.slane %v1502, 2
      %v1516 = vsel %vm1266, %v1513, %v1515
      %v1517 = vrot.slane %v1503, 2
      %v1518 = vsel %vm1266, %v1515, %v1517
      %v1519 = vrot.slane %v1504, 2
      %v1520 = vsel %vm1266, %v1517, %v1519
      %v1521 = vrot.slane %v1505, 2
      %v1522 = vsel %vm1266, %v1519, %v1521
      %v1523 = vrot.slane %v1506, 2
      %v1524 = vsel %vm1266, %v1521, %v1523
      %v1525 = vrot.slane %v1507, 2
      %v1526 = vsel %vm1266, %v1523, %v1525
      %v1528 = vsel %vm328, %v1510, 0
      %v1531 = vsel %vm328, %v1512, 0
      %v1534 = vsel %vm328, %v1514, 0
      %v1537 = vsel %vm328, %v1516, 0
      %v1540 = vsel %vm328, %v1518, 0
      %v1543 = vsel %vm328, %v1520, 0
      %v1546 = vsel %vm328, %v1522, 0
      %v1549 = vsel %vm328, %v1524, 0
      %v1552 = vsel %vm328, %v1526, 0
      %v1555 = vsel %vm356, %v1459, 0
      %1557 = vmatprep.subr.bf16.mxu0 0
      %1558 = vmatpush1.bf16.msra.mxu0 %v1555
      %1559 = vmatprep.subr.bf16.mxu0 0
      %1560 = vmatpush1.bf16.msra.mxu0 0
      %1561 = vmatprep.subr.bf16.mxu0 0
      %1562 = vmatpush1.bf16.msra.mxu0 0
      %1563 = vmatprep.subr.bf16.mxu0 0
      %1564 = vmatpush1.bf16.msra.mxu0 0
      %1565 = vmatprep.subr.bf16.mxu0 0
      %1566 = vmatpush1.bf16.msra.mxu0 0
      %1567 = vmatprep.subr.bf16.mxu0 0
      %1568 = vmatpush1.bf16.msra.mxu0 0
      %1569 = vmatprep.subr.bf16.mxu0 0
      %1570 = vmatpush1.bf16.msra.mxu0 0
      %1571 = vmatprep.subr.bf16.mxu0 0
      %1572 = vmatpush1.bf16.msra.mxu0 0
      %1573 = vmatprep.subr.bf16.mxu0 0
      %1574 = vmatpush1.bf16.msra.mxu0 0
      %1575 = vmatprep.subr.bf16.mxu0 0
      %1576 = vmatpush1.bf16.msra.mxu0 0
      %1577 = vmatprep.subr.bf16.mxu0 0
      %1578 = vmatpush1.bf16.msra.mxu0 0
      %1579 = vmatprep.subr.bf16.mxu0 0
      %1580 = vmatpush1.bf16.msra.mxu0 0
      %1581 = vmatprep.subr.bf16.mxu0 0
      %1582 = vmatpush1.bf16.msra.mxu0 0
      %1583 = vmatprep.subr.bf16.mxu0 0
      %1584 = vmatpush1.bf16.msra.mxu0 0
      %1585 = vmatprep.subr.bf16.mxu0 0
      %1586 = vmatpush1.bf16.msra.mxu0 0
      %1587 = vmatprep.subr.bf16.mxu0 0
      %1588 = vmatpush1.bf16.msra.mxu0 0
      %1589 = vmatprep.mubr.bf16.mxu0 0
      %1590 = vmatmul.mubr.bf16.gmra.mrb[0].mxu0 %v1528
      %v1591 = vpop.f32.mrb[0].mxu0
      %v1592 = vadd.f32 0.0, %v1591
      %v1593 = vpop.f32.mrb[0].mxu0
      %v1594 = vpop.f32.mrb[0].mxu0
      %v1595 = vadd.f32 0.0, %v1594
      %v1596 = vpop.f32.mrb[0].mxu0
      %1597 = vmatprep.mubr.bf16.mxu0 0
      %1598 = vmatmul.mubr.bf16.gmra.mrb[0].mxu0 %v1531
      %v1599 = vpop.f32.mrb[0].mxu0
      %v1600 = vadd.f32 0.0, %v1599
      %v1601 = vpop.f32.mrb[0].mxu0
      %v1602 = vpop.f32.mrb[0].mxu0
      %v1603 = vadd.f32 0.0, %v1602
      %v1604 = vpop.f32.mrb[0].mxu0
      %1605 = vmatprep.mubr.bf16.mxu0 0
      %1606 = vmatmul.mubr.bf16.gmra.mrb[0].mxu0 %v1534
      %v1607 = vpop.f32.mrb[0].mxu0
      %v1608 = vadd.f32 0.0, %v1607
      %v1609 = vpop.f32.mrb[0].mxu0
      %v1610 = vpop.f32.mrb[0].mxu0
      %v1611 = vadd.f32 0.0, %v1610
      %v1612 = vpop.f32.mrb[0].mxu0
      %1613 = vmatprep.mubr.bf16.mxu0 0
      %1614 = vmatmul.mubr.bf16.gmra.mrb[0].mxu0 %v1537
      %v1615 = vpop.f32.mrb[0].mxu0
      %v1616 = vadd.f32 0.0, %v1615
      %v1617 = vpop.f32.mrb[0].mxu0
      %v1618 = vpop.f32.mrb[0].mxu0
      %v1619 = vadd.f32 0.0, %v1618
      %v1620 = vpop.f32.mrb[0].mxu0
      %1621 = vmatprep.mubr.bf16.mxu0 0
      %1622 = vmatmul.mubr.bf16.gmra.mrb[0].mxu0 %v1540
      %v1623 = vpop.f32.mrb[0].mxu0
      %v1624 = vadd.f32 0.0, %v1623
      %v1625 = vpop.f32.mrb[0].mxu0
      %v1626 = vpop.f32.mrb[0].mxu0
      %v1627 = vadd.f32 0.0, %v1626
      %v1628 = vpop.f32.mrb[0].mxu0
      %1629 = vmatprep.mubr.bf16.mxu0 0
      %1630 = vmatmul.mubr.bf16.gmra.mrb[0].mxu0 %v1543
      %v1631 = vpop.f32.mrb[0].mxu0
      %v1632 = vadd.f32 0.0, %v1631
      %v1633 = vpop.f32.mrb[0].mxu0
      %v1634 = vpop.f32.mrb[0].mxu0
      %v1635 = vadd.f32 0.0, %v1634
      %v1636 = vpop.f32.mrb[0].mxu0
      %1637 = vmatprep.mubr.bf16.mxu0 0
      %1638 = vmatmul.mubr.bf16.gmra.mrb[0].mxu0 %v1546
      %v1639 = vpop.f32.mrb[0].mxu0
      %v1640 = vadd.f32 0.0, %v1639
      %v1641 = vpop.f32.mrb[0].mxu0
      %v1642 = vpop.f32.mrb[0].mxu0
      %v1643 = vadd.f32 0.0, %v1642
      %v1644 = vpop.f32.mrb[0].mxu0
      %1645 = vmatprep.mubr.bf16.mxu0 0
      %1646 = vmatmul.mubr.bf16.gmra.mrb[0].mxu0 %v1549
      %v1647 = vpop.f32.mrb[0].mxu0
      %v1648 = vadd.f32 0.0, %v1647
      %v1649 = vpop.f32.mrb[0].mxu0
      %v1650 = vpop.f32.mrb[0].mxu0
      %v1651 = vadd.f32 0.0, %v1650
      %v1652 = vpop.f32.mrb[0].mxu0
      %1653 = vmatprep.mubr.bf16.mxu0 0
      %1654 = vmatmul.mubr.bf16.gmra.mrb[0].mxu0 %v1552
      %v1655 = vpop.f32.mrb[0].mxu0
      %v1656 = vadd.f32 0.0, %v1655
      %v1657 = vpop.f32.mrb[0].mxu0
      %v1658 = vpop.f32.mrb[0].mxu0
      %v1659 = vadd.f32 0.0, %v1658
      %v1660 = vpop.f32.mrb[0].mxu0
      %1661 = vdwg.mxu0
      %v1662 = vadd.f32 %v1421, %v1592
      %v1663 = vadd.f32 %v1422, %v1595
      %v1664 = vadd.f32 %v1423, %v1600
      %v1665 = vadd.f32 %v1424, %v1603
      %v1666 = vadd.f32 %v1425, %v1608
      %v1667 = vadd.f32 %v1426, %v1611
      %v1668 = vadd.f32 %v1427, %v1616
      %v1669 = vadd.f32 %v1428, %v1619
      %v1670 = vadd.f32 %v1429, %v1624
      %v1671 = vadd.f32 %v1430, %v1627
      %v1672 = vadd.f32 %v1431, %v1632
      %v1673 = vadd.f32 %v1432, %v1635
      %v1674 = vadd.f32 %v1433, %v1640
      %v1675 = vadd.f32 %v1434, %v1643
      %v1676 = vadd.f32 %v1435, %v1648
      %v1677 = vadd.f32 %v1436, %v1651
      %v1678 = vadd.f32 %v1437, %v1656
      %v1679 = vadd.f32 %v1438, %v1659
      %v1680 = vld [vmem:[%s170 + $0x58] sm:$0x7]
      %s1681 = scalar_lea.vmem %s1, 28
      %v1682 = vld [vmem:[%s1681] sm:$0xf]
      %v1684 = vunpack.c.l.b16 %v1680
      %v1685 = vpack.c.b16 %v1684, %v1684
      %vm1686 = vsmask.f32 5376
      %v1688 = vshrl.u32 %v1498, 16
      %v1690 = vrot.slane %v1688, 2
      %v1691 = vshll.u32 %v1498, 16
      %v1693 = vrot.slane %v1691, 3
      %v1694 = vor.u32 %v1690, %v1693
      %v1696 = vshrl.u32 %v1499, 16
      %v1698 = vrot.slane %v1696, 2
      %v1699 = vshll.u32 %v1499, 16
      %v1701 = vrot.slane %v1699, 3
      %v1702 = vor.u32 %v1698, %v1701
      %v1703 = vsel %vm1686, %v1694, %v1702
      %v1705 = vshrl.u32 %v1500, 16
      %v1707 = vrot.slane %v1705, 2
      %v1708 = vshll.u32 %v1500, 16
      %v1710 = vrot.slane %v1708, 3
      %v1711 = vor.u32 %v1707, %v1710
      %v1712 = vsel %vm1686, %v1702, %v1711
      %v1714 = vshrl.u32 %v1501, 16
      %v1716 = vrot.slane %v1714, 2
      %v1717 = vshll.u32 %v1501, 16
      %v1719 = vrot.slane %v1717, 3
      %v1720 = vor.u32 %v1716, %v1719
      %v1721 = vsel %vm1686, %v1711, %v1720
      %v1723 = vshrl.u32 %v1502, 16
      %v1725 = vrot.slane %v1723, 2
      %v1726 = vshll.u32 %v1502, 16
      %v1728 = vrot.slane %v1726, 3
      %v1729 = vor.u32 %v1725, %v1728
      %v1730 = vsel %vm1686, %v1720, %v1729
      %v1732 = vshrl.u32 %v1503, 16
      %v1734 = vrot.slane %v1732, 2
      %v1735 = vshll.u32 %v1503, 16
      %v1737 = vrot.slane %v1735, 3
      %v1738 = vor.u32 %v1734, %v1737
      %v1739 = vsel %vm1686, %v1729, %v1738
      %v1741 = vshrl.u32 %v1504, 16
      %v1743 = vrot.slane %v1741, 2
      %v1744 = vshll.u32 %v1504, 16
      %v1746 = vrot.slane %v1744, 3
      %v1747 = vor.u32 %v1743, %v1746
      %v1748 = vsel %vm1686, %v1738, %v1747
      %v1750 = vshrl.u32 %v1505, 16
      %v1752 = vrot.slane %v1750, 2
      %v1753 = vshll.u32 %v1505, 16
      %v1755 = vrot.slane %v1753, 3
      %v1756 = vor.u32 %v1752, %v1755
      %v1757 = vsel %vm1686, %v1747, %v1756
      %v1759 = vshrl.u32 %v1506, 16
      %v1761 = vrot.slane %v1759, 2
      %v1762 = vshll.u32 %v1506, 16
      %v1764 = vrot.slane %v1762, 3
      %v1765 = vor.u32 %v1761, %v1764
      %v1766 = vsel %vm1686, %v1756, %v1765
      %v1768 = vshrl.u32 %v1685, 16
      %v1770 = vrot.slane %v1768, 2
      %v1771 = vshll.u32 %v1685, 16
      %v1773 = vrot.slane %v1771, 3
      %v1774 = vor.u32 %v1770, %v1773
      %v1775 = vsel %vm1686, %v1765, %v1774
      %v1777 = vsel %vm328, %v1703, 0
      %v1780 = vsel %vm328, %v1712, 0
      %v1783 = vsel %vm328, %v1721, 0
      %v1786 = vsel %vm328, %v1730, 0
      %v1789 = vsel %vm328, %v1739, 0
      %v1792 = vsel %vm328, %v1748, 0
      %v1795 = vsel %vm328, %v1757, 0
      %v1798 = vsel %vm328, %v1766, 0
      %v1801 = vsel %vm328, %v1775, 0
      %v1804 = vsel %vm356, %v1682, 0
      %1806 = vmatprep.subr.bf16.mxu0 0
      %1807 = vmatpush1.bf16.msra.mxu0 %v1804
      %1808 = vmatprep.subr.bf16.mxu0 0
      %1809 = vmatpush1.bf16.msra.mxu0 0
      %1810 = vmatprep.subr.bf16.mxu0 0
      %1811 = vmatpush1.bf16.msra.mxu0 0
      %1812 = vmatprep.subr.bf16.mxu0 0
      %1813 = vmatpush1.bf16.msra.mxu0 0
      %1814 = vmatprep.subr.bf16.mxu0 0
      %1815 = vmatpush1.bf16.msra.mxu0 0
      %1816 = vmatprep.subr.bf16.mxu0 0
      %1817 = vmatpush1.bf16.msra.mxu0 0
      %1818 = vmatprep.subr.bf16.mxu0 0
      %1819 = vmatpush1.bf16.msra.mxu0 0
      %1820 = vmatprep.subr.bf16.mxu0 0
      %1821 = vmatpush1.bf16.msra.mxu0 0
      %1822 = vmatprep.subr.bf16.mxu0 0
      %1823 = vmatpush1.bf16.msra.mxu0 0
      %1824 = vmatprep.subr.bf16.mxu0 0
      %1825 = vmatpush1.bf16.msra.mxu0 0
      %1826 = vmatprep.subr.bf16.mxu0 0
      %1827 = vmatpush1.bf16.msra.mxu0 0
      %1828 = vmatprep.subr.bf16.mxu0 0
      %1829 = vmatpush1.bf16.msra.mxu0 0
      %1830 = vmatprep.subr.bf16.mxu0 0
      %1831 = vmatpush1.bf16.msra.mxu0 0
      %1832 = vmatprep.subr.bf16.mxu0 0
      %1833 = vmatpush1.bf16.msra.mxu0 0
      %1834 = vmatprep.subr.bf16.mxu0 0
      %1835 = vmatpush1.bf16.msra.mxu0 0
      %1836 = vmatprep.subr.bf16.mxu0 0
      %1837 = vmatpush1.bf16.msra.mxu0 0
      %1838 = vmatprep.mubr.bf16.mxu0 0
      %1839 = vmatmul.mubr.bf16.gmra.mrb[0].mxu0 %v1777
      %v1840 = vpop.f32.mrb[0].mxu0
      %v1841 = vadd.f32 0.0, %v1840
      %v1842 = vpop.f32.mrb[0].mxu0
      %v1843 = vpop.f32.mrb[0].mxu0
      %v1844 = vadd.f32 0.0, %v1843
      %v1845 = vpop.f32.mrb[0].mxu0
      %1846 = vmatprep.mubr.bf16.mxu0 0
      %1847 = vmatmul.mubr.bf16.gmra.mrb[0].mxu0 %v1780
      %v1848 = vpop.f32.mrb[0].mxu0
      %v1849 = vadd.f32 0.0, %v1848
      %v1850 = vpop.f32.mrb[0].mxu0
      %v1851 = vpop.f32.mrb[0].mxu0
      %v1852 = vadd.f32 0.0, %v1851
      %v1853 = vpop.f32.mrb[0].mxu0
      %1854 = vmatprep.mubr.bf16.mxu0 0
      %1855 = vmatmul.mubr.bf16.gmra.mrb[0].mxu0 %v1783
      %v1856 = vpop.f32.mrb[0].mxu0
      %v1857 = vadd.f32 0.0, %v1856
      %v1858 = vpop.f32.mrb[0].mxu0
      %v1859 = vpop.f32.mrb[0].mxu0
      %v1860 = vadd.f32 0.0, %v1859
      %v1861 = vpop.f32.mrb[0].mxu0
      %1862 = vmatprep.mubr.bf16.mxu0 0
      %1863 = vmatmul.mubr.bf16.gmra.mrb[0].mxu0 %v1786
      %v1864 = vpop.f32.mrb[0].mxu0
      %v1865 = vadd.f32 0.0, %v1864
      %v1866 = vpop.f32.mrb[0].mxu0
      %v1867 = vpop.f32.mrb[0].mxu0
      %v1868 = vadd.f32 0.0, %v1867
      %v1869 = vpop.f32.mrb[0].mxu0
      %1870 = vmatprep.mubr.bf16.mxu0 0
      %1871 = vmatmul.mubr.bf16.gmra.mrb[0].mxu0 %v1789
      %v1872 = vpop.f32.mrb[0].mxu0
      %v1873 = vadd.f32 0.0, %v1872
      %v1874 = vpop.f32.mrb[0].mxu0
      %v1875 = vpop.f32.mrb[0].mxu0
      %v1876 = vadd.f32 0.0, %v1875
      %v1877 = vpop.f32.mrb[0].mxu0
      %1878 = vmatprep.mubr.bf16.mxu0 0
      %1879 = vmatmul.mubr.bf16.gmra.mrb[0].mxu0 %v1792
      %v1880 = vpop.f32.mrb[0].mxu0
      %v1881 = vadd.f32 0.0, %v1880
      %v1882 = vpop.f32.mrb[0].mxu0
      %v1883 = vpop.f32.mrb[0].mxu0
      %v1884 = vadd.f32 0.0, %v1883
      %v1885 = vpop.f32.mrb[0].mxu0
      %1886 = vmatprep.mubr.bf16.mxu0 0
      %1887 = vmatmul.mubr.bf16.gmra.mrb[0].mxu0 %v1795
      %v1888 = vpop.f32.mrb[0].mxu0
      %v1889 = vadd.f32 0.0, %v1888
      %v1890 = vpop.f32.mrb[0].mxu0
      %v1891 = vpop.f32.mrb[0].mxu0
      %v1892 = vadd.f32 0.0, %v1891
      %v1893 = vpop.f32.mrb[0].mxu0
      %1894 = vmatprep.mubr.bf16.mxu0 0
      %1895 = vmatmul.mubr.bf16.gmra.mrb[0].mxu0 %v1798
      %v1896 = vpop.f32.mrb[0].mxu0
      %v1897 = vadd.f32 0.0, %v1896
      %v1898 = vpop.f32.mrb[0].mxu0
      %v1899 = vpop.f32.mrb[0].mxu0
      %v1900 = vadd.f32 0.0, %v1899
      %v1901 = vpop.f32.mrb[0].mxu0
      %1902 = vmatprep.mubr.bf16.mxu0 0
      %1903 = vmatmul.mubr.bf16.gmra.mrb[0].mxu0 %v1801
      %v1904 = vpop.f32.mrb[0].mxu0
      %v1905 = vadd.f32 0.0, %v1904
      %v1906 = vpop.f32.mrb[0].mxu0
      %v1907 = vpop.f32.mrb[0].mxu0
      %v1908 = vadd.f32 0.0, %v1907
      %v1909 = vpop.f32.mrb[0].mxu0
      %1910 = vdwg.mxu0
      %v1911 = vadd.f32 %v1662, %v1841
      %v1912 = vadd.f32 %v1663, %v1844
      %v1913 = vadd.f32 %v1664, %v1849
      %v1914 = vadd.f32 %v1665, %v1852
      %v1915 = vadd.f32 %v1666, %v1857
      %v1916 = vadd.f32 %v1667, %v1860
      %v1917 = vadd.f32 %v1668, %v1865
      %v1918 = vadd.f32 %v1669, %v1868
      %v1919 = vadd.f32 %v1670, %v1873
      %v1920 = vadd.f32 %v1671, %v1876
      %v1921 = vadd.f32 %v1672, %v1881
      %v1922 = vadd.f32 %v1673, %v1884
      %v1923 = vadd.f32 %v1674, %v1889
      %v1924 = vadd.f32 %v1675, %v1892
      %v1925 = vadd.f32 %v1676, %v1897
      %v1926 = vadd.f32 %v1677, %v1900
      %v1927 = vadd.f32 %v1678, %v1905
      %v1928 = vadd.f32 %v1679, %v1908
      %v1929 = vld [vmem:[%s170 + $0x10] sm:$0x8]
      %s1930 = scalar_lea.vmem %s1, 32
      %v1931 = vld [vmem:[%s1930] sm:$0xf]
      %v1933 = vunpack.c.l.b16 %v1929
      %v1934 = vpack.c.b16 %v1480, %v1933
      %vm1935 = vcmask 1044480
      %v1936 = vrot.slane %v1934, 3
      %v1937 = vrot.slane %v1499, 3
      %v1938 = vsel %vm1935, %v1936, %v1937
      %v1939 = vrot.slane %v1500, 3
      %v1940 = vsel %vm1935, %v1937, %v1939
      %v1941 = vrot.slane %v1501, 3
      %v1942 = vsel %vm1935, %v1939, %v1941
      %v1943 = vrot.slane %v1502, 3
      %v1944 = vsel %vm1935, %v1941, %v1943
      %v1945 = vrot.slane %v1503, 3
      %v1946 = vsel %vm1935, %v1943, %v1945
      %v1947 = vrot.slane %v1504, 3
      %v1948 = vsel %vm1935, %v1945, %v1947
      %v1949 = vrot.slane %v1505, 3
      %v1950 = vsel %vm1935, %v1947, %v1949
      %v1951 = vrot.slane %v1506, 3
      %v1952 = vsel %vm1935, %v1949, %v1951
      %v1953 = vrot.slane %v1685, 3
      %v1954 = vsel %vm1935, %v1951, %v1953
      %v1956 = vsel %vm328, %v1938, 0
      %v1959 = vsel %vm328, %v1940, 0
      %v1962 = vsel %vm328, %v1942, 0
      %v1965 = vsel %vm328, %v1944, 0
      %v1968 = vsel %vm328, %v1946, 0
      %v1971 = vsel %vm328, %v1948, 0
      %v1974 = vsel %vm328, %v1950, 0
      %v1977 = vsel %vm328, %v1952, 0
      %v1980 = vsel %vm328, %v1954, 0
      %v1983 = vsel %vm356, %v1931, 0
      %1985 = vmatprep.subr.bf16.mxu0 0
      %1986 = vmatpush1.bf16.msra.mxu0 %v1983
      %1987 = vmatprep.subr.bf16.mxu0 0
      %1988 = vmatpush1.bf16.msra.mxu0 0
      %1989 = vmatprep.subr.bf16.mxu0 0
      %1990 = vmatpush1.bf16.msra.mxu0 0
      %1991 = vmatprep.subr.bf16.mxu0 0
      %1992 = vmatpush1.bf16.msra.mxu0 0
      %1993 = vmatprep.subr.bf16.mxu0 0
      %1994 = vmatpush1.bf16.msra.mxu0 0
      %1995 = vmatprep.subr.bf16.mxu0 0
      %1996 = vmatpush1.bf16.msra.mxu0 0
      %1997 = vmatprep.subr.bf16.mxu0 0
      %1998 = vmatpush1.bf16.msra.mxu0 0
      %1999 = vmatprep.subr.bf16.mxu0 0
      %2000 = vmatpush1.bf16.msra.mxu0 0
      %2001 = vmatprep.subr.bf16.mxu0 0
      %2002 = vmatpush1.bf16.msra.mxu0 0
      %2003 = vmatprep.subr.bf16.mxu0 0
      %2004 = vmatpush1.bf16.msra.mxu0 0
      %2005 = vmatprep.subr.bf16.mxu0 0
      %2006 = vmatpush1.bf16.msra.mxu0 0
      %2007 = vmatprep.subr.bf16.mxu0 0
      %2008 = vmatpush1.bf16.msra.mxu0 0
      %2009 = vmatprep.subr.bf16.mxu0 0
      %2010 = vmatpush1.bf16.msra.mxu0 0
      %2011 = vmatprep.subr.bf16.mxu0 0
      %2012 = vmatpush1.bf16.msra.mxu0 0
      %2013 = vmatprep.subr.bf16.mxu0 0
      %2014 = vmatpush1.bf16.msra.mxu0 0
      %2015 = vmatprep.subr.bf16.mxu0 0
      %2016 = vmatpush1.bf16.msra.mxu0 0
      %2017 = vmatprep.mubr.bf16.mxu0 0
      %2018 = vmatmul.mubr.bf16.gmra.mrb[0].mxu0 %v1956
      %v2019 = vpop.f32.mrb[0].mxu0
      %v2020 = vadd.f32 0.0, %v2019
      %v2021 = vpop.f32.mrb[0].mxu0
      %v2022 = vpop.f32.mrb[0].mxu0
      %v2023 = vadd.f32 0.0, %v2022
      %v2024 = vpop.f32.mrb[0].mxu0
      %2025 = vmatprep.mubr.bf16.mxu0 0
      %2026 = vmatmul.mubr.bf16.gmra.mrb[0].mxu0 %v1959
      %v2027 = vpop.f32.mrb[0].mxu0
      %v2028 = vadd.f32 0.0, %v2027
      %v2029 = vpop.f32.mrb[0].mxu0
      %v2030 = vpop.f32.mrb[0].mxu0
      %v2031 = vadd.f32 0.0, %v2030
      %v2032 = vpop.f32.mrb[0].mxu0
      %2033 = vmatprep.mubr.bf16.mxu0 0
      %2034 = vmatmul.mubr.bf16.gmra.mrb[0].mxu0 %v1962
      %v2035 = vpop.f32.mrb[0].mxu0
      %v2036 = vadd.f32 0.0, %v2035
      %v2037 = vpop.f32.mrb[0].mxu0
      %v2038 = vpop.f32.mrb[0].mxu0
      %v2039 = vadd.f32 0.0, %v2038
      %v2040 = vpop.f32.mrb[0].mxu0
      %2041 = vmatprep.mubr.bf16.mxu0 0
      %2042 = vmatmul.mubr.bf16.gmra.mrb[0].mxu0 %v1965
      %v2043 = vpop.f32.mrb[0].mxu0
      %v2044 = vadd.f32 0.0, %v2043
      %v2045 = vpop.f32.mrb[0].mxu0
      %v2046 = vpop.f32.mrb[0].mxu0
      %v2047 = vadd.f32 0.0, %v2046
      %v2048 = vpop.f32.mrb[0].mxu0
      %2049 = vmatprep.mubr.bf16.mxu0 0
      %2050 = vmatmul.mubr.bf16.gmra.mrb[0].mxu0 %v1968
      %v2051 = vpop.f32.mrb[0].mxu0
      %v2052 = vadd.f32 0.0, %v2051
      %v2053 = vpop.f32.mrb[0].mxu0
      %v2054 = vpop.f32.mrb[0].mxu0
      %v2055 = vadd.f32 0.0, %v2054
      %v2056 = vpop.f32.mrb[0].mxu0
      %2057 = vmatprep.mubr.bf16.mxu0 0
      %2058 = vmatmul.mubr.bf16.gmra.mrb[0].mxu0 %v1971
      %v2059 = vpop.f32.mrb[0].mxu0
      %v2060 = vadd.f32 0.0, %v2059
      %v2061 = vpop.f32.mrb[0].mxu0
      %v2062 = vpop.f32.mrb[0].mxu0
      %v2063 = vadd.f32 0.0, %v2062
      %v2064 = vpop.f32.mrb[0].mxu0
      %2065 = vmatprep.mubr.bf16.mxu0 0
      %2066 = vmatmul.mubr.bf16.gmra.mrb[0].mxu0 %v1974
      %v2067 = vpop.f32.mrb[0].mxu0
      %v2068 = vadd.f32 0.0, %v2067
      %v2069 = vpop.f32.mrb[0].mxu0
      %v2070 = vpop.f32.mrb[0].mxu0
      %v2071 = vadd.f32 0.0, %v2070
      %v2072 = vpop.f32.mrb[0].mxu0
      %2073 = vmatprep.mubr.bf16.mxu0 0
      %2074 = vmatmul.mubr.bf16.gmra.mrb[0].mxu0 %v1977
      %v2075 = vpop.f32.mrb[0].mxu0
      %v2076 = vadd.f32 0.0, %v2075
      %v2077 = vpop.f32.mrb[0].mxu0
      %v2078 = vpop.f32.mrb[0].mxu0
      %v2079 = vadd.f32 0.0, %v2078
      %v2080 = vpop.f32.mrb[0].mxu0
      %2081 = vmatprep.mubr.bf16.mxu0 0
      %2082 = vmatmul.mubr.bf16.gmra.mrb[0].mxu0 %v1980
      %v2083 = vpop.f32.mrb[0].mxu0
      %v2084 = vadd.f32 0.0, %v2083
      %v2085 = vpop.f32.mrb[0].mxu0
      %v2086 = vpop.f32.mrb[0].mxu0
      %v2087 = vadd.f32 0.0, %v2086
      %v2088 = vpop.f32.mrb[0].mxu0
      %2089 = vdwg.mxu0
      %v2090 = vadd.f32 %v1911, %v2020
      %v2091 = vadd.f32 %v1912, %v2023
      %v2092 = vadd.f32 %v1913, %v2028
      %v2093 = vadd.f32 %v1914, %v2031
      %v2094 = vadd.f32 %v1915, %v2036
      %v2095 = vadd.f32 %v1916, %v2039
      %v2096 = vadd.f32 %v1917, %v2044
      %v2097 = vadd.f32 %v1918, %v2047
      %v2098 = vadd.f32 %v1919, %v2052
      %v2099 = vadd.f32 %v1920, %v2055
      %v2100 = vadd.f32 %v1921, %v2060
      %v2101 = vadd.f32 %v1922, %v2063
      %v2102 = vadd.f32 %v1923, %v2068
      %v2103 = vadd.f32 %v1924, %v2071
      %v2104 = vadd.f32 %v1925, %v2076
      %v2105 = vadd.f32 %v1926, %v2079
      %v2106 = vadd.f32 %v1927, %v2084
      %v2107 = vadd.f32 %v1928, %v2087
      %vm2108 = vcmask 130048
      %2109 = vst.msk [vmem:[%s179] sm:$0xff] %vm2108, %v2090
      %2110 = vst.msk [vmem:[%s179 + $0x8] sm:$0xff] %vm2108, %v2091
      %2111 = vst.msk [vmem:[%s179 + $0x10] sm:$0xff] %vm2108, %v2092
      %2112 = vst.msk [vmem:[%s179 + $0x18] sm:$0xff] %vm2108, %v2093
      %2113 = vst.msk [vmem:[%s179 + $0x20] sm:$0xff] %vm2108, %v2094
      %2114 = vst.msk [vmem:[%s179 + $0x28] sm:$0xff] %vm2108, %v2095
      %2115 = vst.msk [vmem:[%s179 + $0x30] sm:$0xff] %vm2108, %v2096
      %2116 = vst.msk [vmem:[%s179 + $0x38] sm:$0xff] %vm2108, %v2097
      %2117 = vst.msk [vmem:[%s179 + $0x40] sm:$0xff] %vm2108, %v2098
      %2118 = vst.msk [vmem:[%s179 + $0x48] sm:$0xff] %vm2108, %v2099
      %2119 = vst.msk [vmem:[%s179 + $0x50] sm:$0xff] %vm2108, %v2100
      %2120 = vst.msk [vmem:[%s179 + $0x58] sm:$0xff] %vm2108, %v2101
      %2121 = vst.msk [vmem:[%s179 + $0x60] sm:$0xff] %vm2108, %v2102
      %2122 = vst.msk [vmem:[%s179 + $0x68] sm:$0xff] %vm2108, %v2103
      %2123 = vst.msk [vmem:[%s179 + $0x70] sm:$0xff] %vm2108, %v2104
      %2124 = vst.msk [vmem:[%s179 + $0x78] sm:$0xff] %vm2108, %v2105
      %2125 = vst.msk [vmem:[%s179 + $0x80] sm:$0xff] %vm2108, %v2106
      %2126 = vst.msk [vmem:[%s179 + $0x88] sm:$0xff] %vm2108, %v2107
      %p2127 = scmp.lt.s32.totalorder %s17, 1
      %s2128 = scalar_select %p2127, %s17, 1
      %p2129 = scmp.lt.s32.totalorder %s18, 1
      %s2130 = scalar_select %p2129, %s18, 1
      %s2131 = smul.addr %s2130, 18
      %s2132 = smul.addr %s2128, 36
      %s2133 = sadd.s32 %s2131, %s2132
      %s2134 = smul.addr %s2133, 8
      %s2135 = scalar_lea.vmem %s2, %s2134
      // Predicated region
      $region29: #{upsample_fwd.1} parent=27 // pred_check
        %p2136 = pneg %p94
      $region30: #{upsample_fwd.1} parent=27 // pred_check_branch
        %2138 = sbr.rel (%p2136) target = $region32
      $region31: #{upsample_fwd.1} parent=27 // pred_region
        _
      $region32: #{upsample_fwd.1} parent=27 // pred_fallthru
        _
    $region28: #{upsample_fwd.1} parent=5 // pred_fallthru
      _
    %p2139 = scmp.le.s32.totalorder 2, %s8
    // Predicated region
    $region33: #{upsample_fwd.1} parent=5 // pred_check
      %p2140 = pneg %p2139
    $region34: #{upsample_fwd.1} parent=5 // pred_check_branch
      %2142 = sbr.rel (%p2140) target = $region36
    $region35: #{upsample_fwd.1} parent=5 // pred_region
      %s2143 = ssub.s32 %s8, 2
      // Predicated region
      $region37: #{upsample_fwd.1} parent=35 // pred_check
        %p2144 = pneg %p100
      $region38: #{upsample_fwd.1} parent=35 // pred_check_branch
        %2146 = sbr.rel (%p2144) target = $region40
      $region39: #{upsample_fwd.1} parent=35 // pred_region
        %p2147 = scmp.lt.s32.totalorder %s19, 1
        %s2148 = scalar_select %p2147, %s19, 1
        %p2149 = scmp.lt.s32.totalorder %s20, 1
        %s2150 = scalar_select %p2149, %s20, 1
        %s2151 = smul.addr %s2150, 18
        %s2152 = smul.addr %s2148, 36
        %s2153 = sadd.s32 %s2151, %s2152
        %s2154 = smul.addr %s2153, 8
        %s2155 = scalar_lea.vmem %s2, %s2154
      $region40: #{upsample_fwd.1} parent=35 // pred_fallthru
        _
    $region36: #{upsample_fwd.1} parent=5 // pred_fallthru
      _
  $region6: #{upsample_fwd.1} parent=0 // loop_footer
    %s12 = sadd.s32 1, %s8
  $region7: #{upsample_fwd.1} parent=0 // loop_footer_branch
    %7 = sbr.rel target = $region3
  $region8: #{upsample_fwd.1} parent=0 // loop_exit
    _

</llo_original>
